<compile_context>
chip_gen: v7x
topology: tpu7x:2x2x1
jax: 0.10.0
libtpu: 0.0.40
codegen_flags: <defaults>
</compile_context>

<pallas_src>
import functools

import jax
import jax.numpy as jnp
from jax import lax
from jax.experimental import pallas as pl
from jax.experimental.pallas import tpu as pltpu

# ----- Model hyper-parameters (LstmCnnTagger.__init__ arguments) -----
WORD_EMB_DIM = 8
LETTER_EMB_DIM = 16
HIDDEN_DIM = 16
WORD_VOCAB_SIZE = 50
LETTER_VOCAB_SIZE = 30
LETTER_WORD_SIZE = 16
TAGSET_SIZE = 10

BATCHES = 2      # words.shape[0]
SEQ_LEN = 4      # len(words[-1])

CONV1_K = 5          # cnn1 kernel size
CONV2_K = 3          # cnn2 kernel size
POOL1_K = 2          # MaxPool2d(2, 2)
CONV1_OUT_CH = 32


def tagger_kernel(p1_ref, w1_ref, b1_ref, w2_ref, b2_ref, we_ref,
                  wih_cf_ref, wih_we_ref, whh_ref, bl_ref, wo_ref, bo_ref,
                  out_ref, *, n_words, batches, seq_len, hidden_dim, pool1_hw):
    f32 = jnp.float32
    N = n_words                      # B*T flattened words
    B = batches
    T = seq_len
    H = hidden_dim
    P = pool1_hw                     # pooled conv1 map is P x P (= 6 x 6)

    # ---- cnn1: single im2col GEMM on the MXU -----------------------------
    # p1 rows are ordered (ph, pw, oh, ow, n): the 4 max-pool quadrants are the
    # outermost row blocks, so MaxPool2d(2,2)+ReLU is 3 contiguous-slice maxes.
    h1 = jnp.dot(p1_ref[...], w1_ref[...], preferred_element_type=f32) + b1_ref[...]
    Q = P * P * N                    # rows per pool quadrant (= 288)
    pooled = jnp.maximum(jnp.maximum(h1[0 * Q:1 * Q], h1[1 * Q:2 * Q]),
                         jnp.maximum(h1[2 * Q:3 * Q], h1[3 * Q:4 * Q]))
    pooled = jnp.maximum(pooled, 0.0)            # (P*P*N, 32), rows (oh, ow, n)

    # ---- cnn2: single fused-K GEMM ----------------------------------------
    # MaxPool2d(2, 10) on the 4x4 conv2 map only reads outputs (oh2, ow2) in
    # {0,1}^2, so only those 4 positions per word are computed.
    # Patch rows: (oh2, ow2, n); patch cols: (kh, kw, c) -> K = 9*32 = 288.
    blocks = []
    for kh in range(CONV2_K):
        for kw in range(CONV2_K):
            r_top = (kh * P + kw) * N            # pooled rows for oh2 = 0 (ow2 = 0, 1)
            r_bot = ((kh + 1) * P + kw) * N      # pooled rows for oh2 = 1 (ow2 = 0, 1)
            blocks.append(jnp.concatenate(
                [pooled[r_top:r_top + 2 * N, :],
                 pooled[r_bot:r_bot + 2 * N, :]], axis=0))       # (4N, 32)
    p2 = jnp.concatenate(blocks, axis=1)                          # (4N, 288)
    h2 = jnp.dot(p2, w2_ref[...], preferred_element_type=f32) + b2_ref[...]  # (4N, E)

    # max_pool_last (top-left 2x2 of the 4x4 map) + ReLU -> (N, E)
    cnn_feat = jnp.maximum(
        jnp.maximum(jnp.maximum(h2[0:N], h2[N:2 * N]),
                    jnp.maximum(h2[2 * N:3 * N], h2[3 * N:4 * N])), 0.0)

    # ---- LSTM over time + hidden2tag + log_softmax ------------------------
    # Bug-compatible with torch: cnn_feat.view(T,B,E) / word_embeds.view(T,B,E)
    # REINTERPRET the (b, t)-row-major buffers, so step t / batch b reads flat
    # row t*B + b.  Do NOT "fix" this into a real transpose.
    # Input-side matmuls hoisted out of the time loop (one pass over all N rows).
    g_in = (jnp.dot(cnn_feat, wih_cf_ref[...], preferred_element_type=f32)
            + jnp.dot(we_ref[...], wih_we_ref[...], preferred_element_type=f32)
            + bl_ref[...])                                        # (N, 4H)

    whh = whh_ref[...]
    h = jnp.zeros((B, H), f32)
    c = jnp.zeros((B, H), f32)
    hs = []
    for t in range(T):
        g = g_in[t * B:(t + 1) * B, :] + jnp.dot(h, whh, preferred_element_type=f32)
        # sigmoid / tanh of the whole (B, 4H) gate vreg, routed to the EUP.
        sg = pl.reciprocal(1.0 + jnp.exp(-g), approx=True)
        th = jnp.tanh(g)
        c = sg[:, H:2 * H] * c + sg[:, 0:H] * th[:, 2 * H:3 * H]   # f*c + i*g
        h = sg[:, 3 * H:4 * H] * jnp.tanh(c)                       # o*tanh(c)
        hs.append(h)

    # Tag head + log_softmax + store, all batched outside the time loop.
    hseq = jnp.concatenate(hs, axis=0)                             # (T*B, H)
    logits = jnp.dot(hseq, wo_ref[...], preferred_element_type=f32) + bo_ref[...]
    z = logits - jnp.max(logits, axis=1, keepdims=True)
    lse = jnp.log(jnp.sum(jnp.exp(z), axis=1, keepdims=True))
    out_ref[...] = z - lse                                         # one store


def _conv1_pool_patches(img, conv1_k, pool_k):
    """im2col for conv1 with the 2x2 max-pool quadrant as the outermost row block.

    img: (N, L, D) f32.  Returns (pool_k^2 * P*P*N, conv1_k^2) with
    row = ((ph*pool_k + pw)*P*P + oh*P + ow)*N + n, col = kh*conv1_k + kw,
    holding img[n, pool_k*oh + ph + kh, pool_k*ow + pw + kw].
    """
    N, L, D = img.shape
    P = (L - conv1_k + 1) // pool_k               # pooled map size (6)
    quads = []
    for ph in range(pool_k):
        for pw in range(pool_k):
            taps = []
            for kh in range(conv1_k):
                for kw in range(conv1_k):
                    h0 = ph + kh
                    w0 = pw + kw
                    taps.append(img[:, h0:h0 + pool_k * P - 1:pool_k,
                                    w0:w0 + pool_k * P - 1:pool_k])   # (N, P, P)
            tapped = jnp.stack(taps, axis=-1)                         # (N, P, P, K*K)
            quads.append(jnp.transpose(tapped, (1, 2, 0, 3))
                         .reshape(P * P * N, conv1_k * conv1_k))
    return jnp.concatenate(quads, axis=0)


def lstm_cnn_tagger_forward(words, letters, params):
    B, T = words.shape
    L = LETTER_WORD_SIZE
    D = LETTER_EMB_DIM
    E = WORD_EMB_DIM
    H = HIDDEN_DIM
    N = B * T
    assert L == D, "square letter image assumed by the pooled-map row indexing"

    # Glue (plain JAX): embedding gathers + im2col / weight-layout prep.
    word_embeds = params["word_emb"][words].reshape(N, E).astype(jnp.float32)   # flat (b,t)
    img = params["letter_emb"][letters.reshape(N, L)].astype(jnp.float32)       # (N, L, D)

    p1 = _conv1_pool_patches(img, CONV1_K, POOL1_K)           # (4*P*P*N, 25)
    p1 = jnp.pad(p1, ((0, 0), (0, 32 - CONV1_K * CONV1_K)))   # K 25 -> 32 (aligned, zero taps)
    P = (L - CONV1_K + 1) // POOL1_K                          # 6

    w1 = jnp.transpose(params["cnn1_w"][:, 0], (1, 2, 0)).reshape(
        CONV1_K * CONV1_K, CONV1_OUT_CH)                      # (25, 32), rows (kh, kw)
    w1 = jnp.pad(w1, ((0, 32 - CONV1_K * CONV1_K), (0, 0)))   # match padded K
    b1 = params["cnn1_b"].reshape(1, CONV1_OUT_CH)
    w2 = jnp.transpose(params["cnn2_w"], (2, 3, 1, 0)).reshape(
        CONV2_K * CONV2_K * CONV1_OUT_CH, E)                  # (288, E), rows (kh, kw, c)
    b2 = params["cnn2_b"].reshape(1, E)

    wih = params["lstm_w_ih"]                                 # (4H, 2E), gate order i,f,g,o
    wih_cf = jnp.transpose(wih[:, 0:E])                       # (E, 4H)  cnn_feat half
    wih_we = jnp.transpose(wih[:, E:2 * E])                   # (E, 4H)  word-embed half
    whh = jnp.transpose(params["lstm_w_hh"])                  # (H, 4H)
    bl = (params["lstm_b_ih"] + params["lstm_b_hh"]).reshape(1, 4 * H)
    wo = jnp.transpose(params["fc_w"])                        # (H, tagset)
    bo = params["fc_b"].reshape(1, TAGSET_SIZE)

    kernel = functools.partial(
        tagger_kernel, n_words=N, batches=B, seq_len=T, hidden_dim=H, pool1_hw=P)

    # Gridless: the whole working set is < 1 MiB, far below VMEM on v5e/v6e/v7x.
    # TODO(synk): if B*T is ever scaled up, grid the CNN GEMMs over the word axis
    # with dimension_semantics=("parallel",) so they shard across v7x's 2 cores.
    vmem = pl.BlockSpec(memory_space=pltpu.MemorySpace.VMEM)
    return pl.pallas_call(
        kernel,
        out_shape=jax.ShapeDtypeStruct((T * B, TAGSET_SIZE), jnp.float32),
        in_specs=[vmem] * 12,
        out_specs=vmem,
    )(p1, w1, b1, w2, b2, word_embeds, wih_cf, wih_we, whh, bl, wo, bo)


def reference_forward(words, letters, params):
    """Pure-JAX mirror of the PyTorch forward (for validation)."""
    B, T = words.shape
    L, Dl, E, H = LETTER_WORD_SIZE, LETTER_EMB_DIM, WORD_EMB_DIM, HIDDEN_DIM
    hi = lax.Precision.HIGHEST

    word_embeds = params["word_emb"][words]                                  # (B, T, E)
    letter_embeds = params["letter_emb"][letters.reshape(-1, L)]             # (N, L, Dl)
    x = letter_embeds.reshape(-1, 1, L, Dl).astype(jnp.float32)              # NCHW

    dn = ("NCHW", "OIHW", "NCHW")
    c1 = lax.conv_general_dilated(x, params["cnn1_w"], (1, 1), "VALID",
                                  dimension_numbers=dn, precision=hi)
    c1 = c1 + params["cnn1_b"][None, :, None, None]
    p1 = lax.reduce_window(c1, -jnp.inf, lax.max, (1, 1, 2, 2), (1, 1, 2, 2), "VALID")
    p1 = jnp.maximum(p1, 0.0)
    c2 = lax.conv_general_dilated(p1, params["cnn2_w"], (1, 1), "VALID",
                                  dimension_numbers=dn, precision=hi)
    c2 = c2 + params["cnn2_b"][None, :, None, None]
    p2 = lax.reduce_window(c2, -jnp.inf, lax.max, (1, 1, 2, 2), (1, 1, 10, 10), "VALID")
    p2 = jnp.maximum(p2, 0.0)                                                # (N, E, 1, 1)

    concat = jnp.concatenate([p2.reshape(T, B, E),
                              word_embeds.reshape(T, B, E)], axis=2)         # (T, B, 2E)

    wih, whh = params["lstm_w_ih"], params["lstm_w_hh"]
    bih, bhh = params["lstm_b_ih"], params["lstm_b_hh"]
    h = jnp.zeros((B, H), jnp.float32)
    c = jnp.zeros((B, H), jnp.float32)
    outs = []
    for t in range(T):
        g = (jnp.dot(concat[t], wih.T, precision=hi) + bih
             + jnp.dot(h, whh.T, precision=hi) + bhh)
        i = jax.nn.sigmoid(g[:, 0:H])
        f = jax.nn.sigmoid(g[:, H:2 * H])
        gg = jnp.tanh(g[:, 2 * H:3 * H])
        o = jax.nn.sigmoid(g[:, 3 * H:4 * H])
        c = f * c + i * gg
        h = o * jnp.tanh(c)
        outs.append(h)
    lstm_out = jnp.stack(outs, axis=0).reshape(T * B, H)
    logits = jnp.dot(lstm_out, params["fc_w"].T, precision=hi) + params["fc_b"]
    return jax.nn.log_softmax(logits, axis=1)


if __name__ == "__main__":
    key = jax.random.PRNGKey(0)
    keys = jax.random.split(key, 16)
    params = {
        "word_emb": 0.1 * jax.random.normal(keys[0], (WORD_VOCAB_SIZE, WORD_EMB_DIM), jnp.float32),
        "letter_emb": 0.1 * jax.random.normal(keys[1], (LETTER_VOCAB_SIZE, LETTER_EMB_DIM), jnp.float32),
        "cnn1_w": 0.1 * jax.random.normal(keys[2], (32, 1, 5, 5), jnp.float32),
        "cnn1_b": 0.1 * jax.random.normal(keys[3], (32,), jnp.float32),
        "cnn2_w": 0.1 * jax.random.normal(keys[4], (WORD_EMB_DIM, 32, 3, 3), jnp.float32),
        "cnn2_b": 0.1 * jax.random.normal(keys[5], (WORD_EMB_DIM,), jnp.float32),
        "lstm_w_ih": 0.1 * jax.random.normal(keys[6], (4 * HIDDEN_DIM, 2 * WORD_EMB_DIM), jnp.float32),
        "lstm_w_hh": 0.1 * jax.random.normal(keys[7], (4 * HIDDEN_DIM, HIDDEN_DIM), jnp.float32),
        "lstm_b_ih": 0.1 * jax.random.normal(keys[8], (4 * HIDDEN_DIM,), jnp.float32),
        "lstm_b_hh": 0.1 * jax.random.normal(keys[9], (4 * HIDDEN_DIM,), jnp.float32),
        "fc_w": 0.1 * jax.random.normal(keys[10], (TAGSET_SIZE, HIDDEN_DIM), jnp.float32),
        "fc_b": 0.1 * jax.random.normal(keys[11], (TAGSET_SIZE,), jnp.float32),
    }
    words = jax.random.randint(keys[12], (BATCHES, SEQ_LEN), 0, WORD_VOCAB_SIZE, jnp.int32)
    letters = jax.random.randint(keys[13], (BATCHES, SEQ_LEN, LETTER_WORD_SIZE),
                                 0, LETTER_VOCAB_SIZE, jnp.int32)

    forward = jax.jit(lstm_cnn_tagger_forward)
    out = jax.block_until_ready(forward(words, letters, params))
    ref = jax.block_until_ready(reference_forward(words, letters, params))

    assert out.shape == (SEQ_LEN * BATCHES, TAGSET_SIZE)
    max_err = float(jnp.max(jnp.abs(out - ref)))
    assert max_err < 1e-2, f"kernel/reference mismatch: {max_err}"
    print("KERNEL_OK")
</pallas_src>

<mosaic_0001>
module attributes {stable_mosaic.version = 11 : i64} {
  func.func @tagger_kernel(%arg0: memref<1152x32xf32, #tpu.memory_space<vmem>>, %arg1: memref<32x32xf32, #tpu.memory_space<vmem>>, %arg2: memref<1x32xf32, #tpu.memory_space<vmem>>, %arg3: memref<288x8xf32, #tpu.memory_space<vmem>>, %arg4: memref<1x8xf32, #tpu.memory_space<vmem>>, %arg5: memref<8x8xf32, #tpu.memory_space<vmem>>, %arg6: memref<8x64xf32, #tpu.memory_space<vmem>>, %arg7: memref<8x64xf32, #tpu.memory_space<vmem>>, %arg8: memref<16x64xf32, #tpu.memory_space<vmem>>, %arg9: memref<1x64xf32, #tpu.memory_space<vmem>>, %arg10: memref<16x10xf32, #tpu.memory_space<vmem>>, %arg11: memref<1x10xf32, #tpu.memory_space<vmem>>, %arg12: memref<8x10xf32, #tpu.memory_space<vmem>>) attributes {dimension_semantics = [], scalar_prefetch = 0 : i64, scratch_operands = 0 : i64, tpu.core_type = #tpu.core_type<tc>} {
    %c0 = arith.constant 0 : index
    %c0_0 = arith.constant 0 : index
    %0 = vector.load %arg0[%c0, %c0_0] : memref<1152x32xf32, #tpu.memory_space<vmem>>, vector<1152x32xf32>
    %c0_1 = arith.constant 0 : index
    %c0_2 = arith.constant 0 : index
    %1 = vector.load %arg1[%c0_1, %c0_2] : memref<32x32xf32, #tpu.memory_space<vmem>>, vector<32x32xf32>
    %cst = arith.constant dense<0.000000e+00> : vector<1152x32xf32>
    %2 = tpu.matmul %0, %1, %cst {dimension_numbers = #tpu.dot_dimension_numbers<[1], [0], [0], [1], [0, 0, 1, 1], [], []>} : vector<1152x32xf32>, vector<32x32xf32>, vector<1152x32xf32> -> vector<1152x32xf32>
    %c0_3 = arith.constant 0 : index
    %c0_4 = arith.constant 0 : index
    %3 = vector.load %arg2[%c0_3, %c0_4] : memref<1x32xf32, #tpu.memory_space<vmem>>, vector<1x32xf32>
    %4 = vector.broadcast %3 : vector<1x32xf32> to vector<1152x32xf32>
    %5 = arith.addf %2, %4 : vector<1152x32xf32>
    %6 = vector.extract_strided_slice %5 {offsets = [0, 0], sizes = [288, 32], strides = [1, 1]} : vector<1152x32xf32> to vector<288x32xf32>
    %7 = vector.extract_strided_slice %5 {offsets = [288, 0], sizes = [288, 32], strides = [1, 1]} : vector<1152x32xf32> to vector<288x32xf32>
    %8 = arith.maximumf %6, %7 : vector<288x32xf32>
    %9 = vector.extract_strided_slice %5 {offsets = [576, 0], sizes = [288, 32], strides = [1, 1]} : vector<1152x32xf32> to vector<288x32xf32>
    %10 = vector.extract_strided_slice %5 {offsets = [864, 0], sizes = [288, 32], strides = [1, 1]} : vector<1152x32xf32> to vector<288x32xf32>
    %11 = arith.maximumf %9, %10 : vector<288x32xf32>
    %12 = arith.maximumf %8, %11 : vector<288x32xf32>
    %cst_5 = arith.constant 0.000000e+00 : f32
    %13 = vector.broadcast %cst_5 : f32 to vector<288x32xf32>
    %14 = arith.maximumf %12, %13 : vector<288x32xf32>
    %15 = vector.extract_strided_slice %14 {offsets = [0, 0], sizes = [16, 32], strides = [1, 1]} : vector<288x32xf32> to vector<16x32xf32>
    %16 = vector.extract_strided_slice %14 {offsets = [48, 0], sizes = [16, 32], strides = [1, 1]} : vector<288x32xf32> to vector<16x32xf32>
    %17 = tpu.concatenate %15, %16 in 0 : vector<16x32xf32>, vector<16x32xf32> -> vector<32x32xf32>
    %18 = vector.extract_strided_slice %14 {offsets = [8, 0], sizes = [16, 32], strides = [1, 1]} : vector<288x32xf32> to vector<16x32xf32>
    %19 = vector.extract_strided_slice %14 {offsets = [56, 0], sizes = [16, 32], strides = [1, 1]} : vector<288x32xf32> to vector<16x32xf32>
    %20 = tpu.concatenate %18, %19 in 0 : vector<16x32xf32>, vector<16x32xf32> -> vector<32x32xf32>
    %21 = vector.extract_strided_slice %14 {offsets = [16, 0], sizes = [16, 32], strides = [1, 1]} : vector<288x32xf32> to vector<16x32xf32>
    %22 = vector.extract_strided_slice %14 {offsets = [64, 0], sizes = [16, 32], strides = [1, 1]} : vector<288x32xf32> to vector<16x32xf32>
    %23 = tpu.concatenate %21, %22 in 0 : vector<16x32xf32>, vector<16x32xf32> -> vector<32x32xf32>
    %24 = vector.extract_strided_slice %14 {offsets = [48, 0], sizes = [16, 32], strides = [1, 1]} : vector<288x32xf32> to vector<16x32xf32>
    %25 = vector.extract_strided_slice %14 {offsets = [96, 0], sizes = [16, 32], strides = [1, 1]} : vector<288x32xf32> to vector<16x32xf32>
    %26 = tpu.concatenate %24, %25 in 0 : vector<16x32xf32>, vector<16x32xf32> -> vector<32x32xf32>
    %27 = vector.extract_strided_slice %14 {offsets = [56, 0], sizes = [16, 32], strides = [1, 1]} : vector<288x32xf32> to vector<16x32xf32>
    %28 = vector.extract_strided_slice %14 {offsets = [104, 0], sizes = [16, 32], strides = [1, 1]} : vector<288x32xf32> to vector<16x32xf32>
    %29 = tpu.concatenate %27, %28 in 0 : vector<16x32xf32>, vector<16x32xf32> -> vector<32x32xf32>
    %30 = vector.extract_strided_slice %14 {offsets = [64, 0], sizes = [16, 32], strides = [1, 1]} : vector<288x32xf32> to vector<16x32xf32>
    %31 = vector.extract_strided_slice %14 {offsets = [112, 0], sizes = [16, 32], strides = [1, 1]} : vector<288x32xf32> to vector<16x32xf32>
    %32 = tpu.concatenate %30, %31 in 0 : vector<16x32xf32>, vector<16x32xf32> -> vector<32x32xf32>
    %33 = vector.extract_strided_slice %14 {offsets = [96, 0], sizes = [16, 32], strides = [1, 1]} : vector<288x32xf32> to vector<16x32xf32>
    %34 = vector.extract_strided_slice %14 {offsets = [144, 0], sizes = [16, 32], strides = [1, 1]} : vector<288x32xf32> to vector<16x32xf32>
    %35 = tpu.concatenate %33, %34 in 0 : vector<16x32xf32>, vector<16x32xf32> -> vector<32x32xf32>
    %36 = vector.extract_strided_slice %14 {offsets = [104, 0], sizes = [16, 32], strides = [1, 1]} : vector<288x32xf32> to vector<16x32xf32>
    %37 = vector.extract_strided_slice %14 {offsets = [152, 0], sizes = [16, 32], strides = [1, 1]} : vector<288x32xf32> to vector<16x32xf32>
    %38 = tpu.concatenate %36, %37 in 0 : vector<16x32xf32>, vector<16x32xf32> -> vector<32x32xf32>
    %39 = vector.extract_strided_slice %14 {offsets = [112, 0], sizes = [16, 32], strides = [1, 1]} : vector<288x32xf32> to vector<16x32xf32>
    %40 = vector.extract_strided_slice %14 {offsets = [160, 0], sizes = [16, 32], strides = [1, 1]} : vector<288x32xf32> to vector<16x32xf32>
    %41 = tpu.concatenate %39, %40 in 0 : vector<16x32xf32>, vector<16x32xf32> -> vector<32x32xf32>
    %42 = tpu.concatenate %17, %20, %23, %26, %29, %32, %35, %38, %41 in 1 : vector<32x32xf32>, vector<32x32xf32>, vector<32x32xf32>, vector<32x32xf32>, vector<32x32xf32>, vector<32x32xf32>, vector<32x32xf32>, vector<32x32xf32>, vector<32x32xf32> -> vector<32x288xf32>
    %c0_6 = arith.constant 0 : index
    %c0_7 = arith.constant 0 : index
    %43 = vector.load %arg3[%c0_6, %c0_7] : memref<288x8xf32, #tpu.memory_space<vmem>>, vector<288x8xf32>
    %cst_8 = arith.constant dense<0.000000e+00> : vector<32x8xf32>
    %44 = tpu.matmul %42, %43, %cst_8 {dimension_numbers = #tpu.dot_dimension_numbers<[1], [0], [0], [1], [0, 0, 1, 1], [], []>} : vector<32x288xf32>, vector<288x8xf32>, vector<32x8xf32> -> vector<32x8xf32>
    %c0_9 = arith.constant 0 : index
    %c0_10 = arith.constant 0 : index
    %45 = vector.load %arg4[%c0_9, %c0_10] : memref<1x8xf32, #tpu.memory_space<vmem>>, vector<1x8xf32>
    %46 = vector.broadcast %45 : vector<1x8xf32> to vector<32x8xf32>
    %47 = arith.addf %44, %46 : vector<32x8xf32>
    %48 = vector.extract_strided_slice %47 {offsets = [0, 0], sizes = [8, 8], strides = [1, 1]} : vector<32x8xf32> to vector<8x8xf32>
    %49 = vector.extract_strided_slice %47 {offsets = [8, 0], sizes = [8, 8], strides = [1, 1]} : vector<32x8xf32> to vector<8x8xf32>
    %50 = arith.maximumf %48, %49 : vector<8x8xf32>
    %51 = vector.extract_strided_slice %47 {offsets = [16, 0], sizes = [8, 8], strides = [1, 1]} : vector<32x8xf32> to vector<8x8xf32>
    %52 = vector.extract_strided_slice %47 {offsets = [24, 0], sizes = [8, 8], strides = [1, 1]} : vector<32x8xf32> to vector<8x8xf32>
    %53 = arith.maximumf %51, %52 : vector<8x8xf32>
    %54 = arith.maximumf %50, %53 : vector<8x8xf32>
    %cst_11 = arith.constant 0.000000e+00 : f32
    %55 = vector.broadcast %cst_11 : f32 to vector<8x8xf32>
    %56 = arith.maximumf %54, %55 : vector<8x8xf32>
    %c0_12 = arith.constant 0 : index
    %c0_13 = arith.constant 0 : index
    %57 = vector.load %arg6[%c0_12, %c0_13] : memref<8x64xf32, #tpu.memory_space<vmem>>, vector<8x64xf32>
    %cst_14 = arith.constant dense<0.000000e+00> : vector<8x64xf32>
    %58 = tpu.matmul %56, %57, %cst_14 {dimension_numbers = #tpu.dot_dimension_numbers<[1], [0], [0], [1], [0, 0, 1, 1], [], []>} : vector<8x8xf32>, vector<8x64xf32>, vector<8x64xf32> -> vector<8x64xf32>
    %c0_15 = arith.constant 0 : index
    %c0_16 = arith.constant 0 : index
    %59 = vector.load %arg5[%c0_15, %c0_16] : memref<8x8xf32, #tpu.memory_space<vmem>>, vector<8x8xf32>
    %c0_17 = arith.constant 0 : index
    %c0_18 = arith.constant 0 : index
    %60 = vector.load %arg7[%c0_17, %c0_18] : memref<8x64xf32, #tpu.memory_space<vmem>>, vector<8x64xf32>
    %cst_19 = arith.constant dense<0.000000e+00> : vector<8x64xf32>
    %61 = tpu.matmul %59, %60, %cst_19 {dimension_numbers = #tpu.dot_dimension_numbers<[1], [0], [0], [1], [0, 0, 1, 1], [], []>} : vector<8x8xf32>, vector<8x64xf32>, vector<8x64xf32> -> vector<8x64xf32>
    %62 = arith.addf %58, %61 : vector<8x64xf32>
    %c0_20 = arith.constant 0 : index
    %c0_21 = arith.constant 0 : index
    %63 = vector.load %arg9[%c0_20, %c0_21] : memref<1x64xf32, #tpu.memory_space<vmem>>, vector<1x64xf32>
    %64 = vector.broadcast %63 : vector<1x64xf32> to vector<8x64xf32>
    %65 = arith.addf %62, %64 : vector<8x64xf32>
    %c0_22 = arith.constant 0 : index
    %c0_23 = arith.constant 0 : index
    %66 = vector.load %arg8[%c0_22, %c0_23] : memref<16x64xf32, #tpu.memory_space<vmem>>, vector<16x64xf32>
    %cst_24 = arith.constant 0.000000e+00 : f32
    %67 = vector.broadcast %cst_24 : f32 to vector<2x16xf32>
    %cst_25 = arith.constant 0.000000e+00 : f32
    %68 = vector.broadcast %cst_25 : f32 to vector<2x16xf32>
    %69 = vector.extract_strided_slice %65 {offsets = [0, 0], sizes = [2, 64], strides = [1, 1]} : vector<8x64xf32> to vector<2x64xf32>
    %cst_26 = arith.constant dense<0.000000e+00> : vector<2x64xf32>
    %70 = tpu.matmul %67, %66, %cst_26 {dimension_numbers = #tpu.dot_dimension_numbers<[1], [0], [0], [1], [0, 0, 1, 1], [], []>} : vector<2x16xf32>, vector<16x64xf32>, vector<2x64xf32> -> vector<2x64xf32>
    %71 = arith.addf %69, %70 : vector<2x64xf32>
    %cst_27 = arith.constant 0.000000e+00 : f32
    %72 = vector.broadcast %cst_27 : f32 to vector<2x64xf32>
    %73 = arith.subf %72, %71 : vector<2x64xf32>
    %74 = math.exp %73 : vector<2x64xf32>
    %cst_28 = arith.constant 1.000000e+00 : f32
    %75 = vector.broadcast %cst_28 : f32 to vector<2x64xf32>
    %76 = arith.addf %75, %74 : vector<2x64xf32>
    %77 = tpu.reciprocal %76 {approx = true} : vector<2x64xf32> -> vector<2x64xf32>
    %78 = math.tanh %71 : vector<2x64xf32>
    %79 = vector.extract_strided_slice %77 {offsets = [0, 16], sizes = [2, 16], strides = [1, 1]} : vector<2x64xf32> to vector<2x16xf32>
    %80 = arith.mulf %79, %68 : vector<2x16xf32>
    %81 = vector.extract_strided_slice %77 {offsets = [0, 0], sizes = [2, 16], strides = [1, 1]} : vector<2x64xf32> to vector<2x16xf32>
    %82 = vector.extract_strided_slice %78 {offsets = [0, 32], sizes = [2, 16], strides = [1, 1]} : vector<2x64xf32> to vector<2x16xf32>
    %83 = arith.mulf %81, %82 : vector<2x16xf32>
    %84 = arith.addf %80, %83 : vector<2x16xf32>
    %85 = vector.extract_strided_slice %77 {offsets = [0, 48], sizes = [2, 16], strides = [1, 1]} : vector<2x64xf32> to vector<2x16xf32>
    %86 = math.tanh %84 : vector<2x16xf32>
    %87 = arith.mulf %85, %86 : vector<2x16xf32>
    %88 = vector.extract_strided_slice %65 {offsets = [2, 0], sizes = [2, 64], strides = [1, 1]} : vector<8x64xf32> to vector<2x64xf32>
    %cst_29 = arith.constant dense<0.000000e+00> : vector<2x64xf32>
    %89 = tpu.matmul %87, %66, %cst_29 {dimension_numbers = #tpu.dot_dimension_numbers<[1], [0], [0], [1], [0, 0, 1, 1], [], []>} : vector<2x16xf32>, vector<16x64xf32>, vector<2x64xf32> -> vector<2x64xf32>
    %90 = arith.addf %88, %89 : vector<2x64xf32>
    %cst_30 = arith.constant 0.000000e+00 : f32
    %91 = vector.broadcast %cst_30 : f32 to vector<2x64xf32>
    %92 = arith.subf %91, %90 : vector<2x64xf32>
    %93 = math.exp %92 : vector<2x64xf32>
    %cst_31 = arith.constant 1.000000e+00 : f32
    %94 = vector.broadcast %cst_31 : f32 to vector<2x64xf32>
    %95 = arith.addf %94, %93 : vector<2x64xf32>
    %96 = tpu.reciprocal %95 {approx = true} : vector<2x64xf32> -> vector<2x64xf32>
    %97 = math.tanh %90 : vector<2x64xf32>
    %98 = vector.extract_strided_slice %96 {offsets = [0, 16], sizes = [2, 16], strides = [1, 1]} : vector<2x64xf32> to vector<2x16xf32>
    %99 = arith.mulf %98, %84 : vector<2x16xf32>
    %100 = vector.extract_strided_slice %96 {offsets = [0, 0], sizes = [2, 16], strides = [1, 1]} : vector<2x64xf32> to vector<2x16xf32>
    %101 = vector.extract_strided_slice %97 {offsets = [0, 32], sizes = [2, 16], strides = [1, 1]} : vector<2x64xf32> to vector<2x16xf32>
    %102 = arith.mulf %100, %101 : vector<2x16xf32>
    %103 = arith.addf %99, %102 : vector<2x16xf32>
    %104 = vector.extract_strided_slice %96 {offsets = [0, 48], sizes = [2, 16], strides = [1, 1]} : vector<2x64xf32> to vector<2x16xf32>
    %105 = math.tanh %103 : vector<2x16xf32>
    %106 = arith.mulf %104, %105 : vector<2x16xf32>
    %107 = vector.extract_strided_slice %65 {offsets = [4, 0], sizes = [2, 64], strides = [1, 1]} : vector<8x64xf32> to vector<2x64xf32>
    %cst_32 = arith.constant dense<0.000000e+00> : vector<2x64xf32>
    %108 = tpu.matmul %106, %66, %cst_32 {dimension_numbers = #tpu.dot_dimension_numbers<[1], [0], [0], [1], [0, 0, 1, 1], [], []>} : vector<2x16xf32>, vector<16x64xf32>, vector<2x64xf32> -> vector<2x64xf32>
    %109 = arith.addf %107, %108 : vector<2x64xf32>
    %cst_33 = arith.constant 0.000000e+00 : f32
    %110 = vector.broadcast %cst_33 : f32 to vector<2x64xf32>
    %111 = arith.subf %110, %109 : vector<2x64xf32>
    %112 = math.exp %111 : vector<2x64xf32>
    %cst_34 = arith.constant 1.000000e+00 : f32
    %113 = vector.broadcast %cst_34 : f32 to vector<2x64xf32>
    %114 = arith.addf %113, %112 : vector<2x64xf32>
    %115 = tpu.reciprocal %114 {approx = true} : vector<2x64xf32> -> vector<2x64xf32>
    %116 = math.tanh %109 : vector<2x64xf32>
    %117 = vector.extract_strided_slice %115 {offsets = [0, 16], sizes = [2, 16], strides = [1, 1]} : vector<2x64xf32> to vector<2x16xf32>
    %118 = arith.mulf %117, %103 : vector<2x16xf32>
    %119 = vector.extract_strided_slice %115 {offsets = [0, 0], sizes = [2, 16], strides = [1, 1]} : vector<2x64xf32> to vector<2x16xf32>
    %120 = vector.extract_strided_slice %116 {offsets = [0, 32], sizes = [2, 16], strides = [1, 1]} : vector<2x64xf32> to vector<2x16xf32>
    %121 = arith.mulf %119, %120 : vector<2x16xf32>
    %122 = arith.addf %118, %121 : vector<2x16xf32>
    %123 = vector.extract_strided_slice %115 {offsets = [0, 48], sizes = [2, 16], strides = [1, 1]} : vector<2x64xf32> to vector<2x16xf32>
    %124 = math.tanh %122 : vector<2x16xf32>
    %125 = arith.mulf %123, %124 : vector<2x16xf32>
    %126 = vector.extract_strided_slice %65 {offsets = [6, 0], sizes = [2, 64], strides = [1, 1]} : vector<8x64xf32> to vector<2x64xf32>
    %cst_35 = arith.constant dense<0.000000e+00> : vector<2x64xf32>
    %127 = tpu.matmul %125, %66, %cst_35 {dimension_numbers = #tpu.dot_dimension_numbers<[1], [0], [0], [1], [0, 0, 1, 1], [], []>} : vector<2x16xf32>, vector<16x64xf32>, vector<2x64xf32> -> vector<2x64xf32>
    %128 = arith.addf %126, %127 : vector<2x64xf32>
    %cst_36 = arith.constant 0.000000e+00 : f32
    %129 = vector.broadcast %cst_36 : f32 to vector<2x64xf32>
    %130 = arith.subf %129, %128 : vector<2x64xf32>
    %131 = math.exp %130 : vector<2x64xf32>
    %cst_37 = arith.constant 1.000000e+00 : f32
    %132 = vector.broadcast %cst_37 : f32 to vector<2x64xf32>
    %133 = arith.addf %132, %131 : vector<2x64xf32>
    %134 = tpu.reciprocal %133 {approx = true} : vector<2x64xf32> -> vector<2x64xf32>
    %135 = math.tanh %128 : vector<2x64xf32>
    %136 = vector.extract_strided_slice %134 {offsets = [0, 16], sizes = [2, 16], strides = [1, 1]} : vector<2x64xf32> to vector<2x16xf32>
    %137 = arith.mulf %136, %122 : vector<2x16xf32>
    %138 = vector.extract_strided_slice %134 {offsets = [0, 0], sizes = [2, 16], strides = [1, 1]} : vector<2x64xf32> to vector<2x16xf32>
    %139 = vector.extract_strided_slice %135 {offsets = [0, 32], sizes = [2, 16], strides = [1, 1]} : vector<2x64xf32> to vector<2x16xf32>
    %140 = arith.mulf %138, %139 : vector<2x16xf32>
    %141 = arith.addf %137, %140 : vector<2x16xf32>
    %142 = vector.extract_strided_slice %134 {offsets = [0, 48], sizes = [2, 16], strides = [1, 1]} : vector<2x64xf32> to vector<2x16xf32>
    %143 = math.tanh %141 : vector<2x16xf32>
    %144 = arith.mulf %142, %143 : vector<2x16xf32>
    %145 = tpu.concatenate %87, %106, %125, %144 in 0 : vector<2x16xf32>, vector<2x16xf32>, vector<2x16xf32>, vector<2x16xf32> -> vector<8x16xf32>
    %c0_38 = arith.constant 0 : index
    %c0_39 = arith.constant 0 : index
    %146 = vector.load %arg10[%c0_38, %c0_39] : memref<16x10xf32, #tpu.memory_space<vmem>>, vector<16x10xf32>
    %cst_40 = arith.constant dense<0.000000e+00> : vector<8x10xf32>
    %147 = tpu.matmul %145, %146, %cst_40 {dimension_numbers = #tpu.dot_dimension_numbers<[1], [0], [0], [1], [0, 0, 1, 1], [], []>} : vector<8x16xf32>, vector<16x10xf32>, vector<8x10xf32> -> vector<8x10xf32>
    %c0_41 = arith.constant 0 : index
    %c0_42 = arith.constant 0 : index
    %148 = vector.load %arg11[%c0_41, %c0_42] : memref<1x10xf32, #tpu.memory_space<vmem>>, vector<1x10xf32>
    %149 = vector.broadcast %148 : vector<1x10xf32> to vector<8x10xf32>
    %150 = arith.addf %147, %149 : vector<8x10xf32>
    %cst_43 = arith.constant dense<0xFF800000> : vector<8xf32>
    %151 = vector.multi_reduction <maximumf>, %150, %cst_43 [1] : vector<8x10xf32> to vector<8xf32>
    %152 = vector.shape_cast %151 : vector<8xf32> to vector<8x1xf32>
    %153 = vector.broadcast %152 : vector<8x1xf32> to vector<8x10xf32>
    %154 = arith.subf %150, %153 : vector<8x10xf32>
    %155 = math.exp %154 : vector<8x10xf32>
    %cst_44 = arith.constant dense<0.000000e+00> : vector<8xf32>
    %156 = vector.multi_reduction <add>, %155, %cst_44 [1] : vector<8x10xf32> to vector<8xf32>
    %157 = vector.shape_cast %156 : vector<8xf32> to vector<8x1xf32>
    %158 = math.log %157 : vector<8x1xf32>
    %159 = vector.broadcast %158 : vector<8x1xf32> to vector<8x10xf32>
    %160 = arith.subf %154, %159 : vector<8x10xf32>
    %c0_45 = arith.constant 0 : index
    %c0_46 = arith.constant 0 : index
    %161 = vector.load %arg12[%c0_45, %c0_46] : memref<8x10xf32, #tpu.memory_space<vmem>>, vector<8x10xf32>
    tpu.vector_store %arg12[%c0_45, %c0_46], %160 {strides = array<i32>} : memref<8x10xf32, #tpu.memory_space<vmem>>, vector<8x10xf32>,
    return
  }
}

</mosaic_0001>

<llo_original>
// kernel: lstm_cnn_tagger_forward.1
$region0: #{lstm_cnn_tagger_forward.1}
  #allocation0 [shape = 'u32[]', space=smem, size = 0x4, offset = 0x4, fixed_abs, tag = 'smem constant byte address 0x4 - core index']
  #allocation1 [shape = 'u32[144,128]{1,0:T(1,128)}', space=vmem, size = 0x12000, scoped, tag = 'internal scratch']
  %s0 = inlined_call_operand.vmem [shape: f32[1152,32], index: 0, kind: input, shape index: {}]
  %s1 = inlined_call_operand.vmem [shape: f32[32,32], index: 1, kind: input, shape index: {}]
  %s2 = inlined_call_operand.vmem [shape: f32[1,32], index: 2, kind: input, shape index: {}]
  %s3 = inlined_call_operand.vmem [shape: f32[288,8], index: 3, kind: input, shape index: {}]
  %s4 = inlined_call_operand.vmem [shape: f32[1,8], index: 4, kind: input, shape index: {}]
  %s5 = inlined_call_operand.vmem [shape: f32[8,8], index: 5, kind: input, shape index: {}]
  %s6 = inlined_call_operand.vmem [shape: f32[8,64], index: 6, kind: input, shape index: {}]
  %s7 = inlined_call_operand.vmem [shape: f32[8,64], index: 7, kind: input, shape index: {}]
  %s8 = inlined_call_operand.vmem [shape: f32[16,64], index: 8, kind: input, shape index: {}]
  %s9 = inlined_call_operand.vmem [shape: f32[1,64], index: 9, kind: input, shape index: {}]
  %s10 = inlined_call_operand.vmem [shape: f32[16,10], index: 10, kind: input, shape index: {}]
  %s11 = inlined_call_operand.vmem [shape: f32[1,10], index: 11, kind: input, shape index: {}]
  %s12 = inlined_call_operand.hbm [shape: f32[8,10], index: 12, kind: output, shape index: {}]
  %s13 = sld [smem:[#allocation0]]
  $region58: #{lstm_cnn_tagger_forward.1} parent=0
    _
  %s15 = ssub.s32 1, %s13
  %s16 = scalar_select 0, %s15, %s13
  $region1: #{lstm_cnn_tagger_forward.1} parent=0
    #allocation2 [shape = 'u8[4096]{0}', space=vmem, size = 0x1000, scoped, tag = 'output window, operand 0, single buffered']
    #allocation3 [shape = 's32[1]{0}', space=sflag, size = 0x4, scoped, tag = 'scoped memory for lstm_cnn_tagger_forward.1']
    %17 = vsyncpa [#allocation3], 0
    // Predicated region
    $region2: #{lstm_cnn_tagger_forward.1} parent=1 // pred_check
      _
    $region3: #{lstm_cnn_tagger_forward.1} parent=1 // pred_check_branch
      %19 = sbr.rel (0) target = $region5
    $region4: #{lstm_cnn_tagger_forward.1} parent=1 // pred_region
      _
    $region5: #{lstm_cnn_tagger_forward.1} parent=1 // pred_fallthru
      _
    // Predicated region
    $region6: #{lstm_cnn_tagger_forward.1} parent=1 // pred_check
      _
    $region7: #{lstm_cnn_tagger_forward.1} parent=1 // pred_check_branch
      %21 = sbr.rel (0) target = $region9
    $region8: #{lstm_cnn_tagger_forward.1} parent=1 // pred_region
      _
    $region9: #{lstm_cnn_tagger_forward.1} parent=1 // pred_fallthru
      _
    // Predicated region
    $region10: #{lstm_cnn_tagger_forward.1} parent=1 // pred_check
      _
    $region11: #{lstm_cnn_tagger_forward.1} parent=1 // pred_check_branch
      %23 = sbr.rel (0) target = $region13
    $region12: #{lstm_cnn_tagger_forward.1} parent=1 // pred_region
      _
    $region13: #{lstm_cnn_tagger_forward.1} parent=1 // pred_fallthru
      _
    // Predicated region
    $region14: #{lstm_cnn_tagger_forward.1} parent=1 // pred_check
      _
    $region15: #{lstm_cnn_tagger_forward.1} parent=1 // pred_check_branch
      %25 = sbr.rel (0) target = $region17
    $region16: #{lstm_cnn_tagger_forward.1} parent=1 // pred_region
      _
    $region17: #{lstm_cnn_tagger_forward.1} parent=1 // pred_fallthru
      _
    // Predicated region
    $region18: #{lstm_cnn_tagger_forward.1} parent=1 // pred_check
      _
    $region19: #{lstm_cnn_tagger_forward.1} parent=1 // pred_check_branch
      %27 = sbr.rel (0) target = $region21
    $region20: #{lstm_cnn_tagger_forward.1} parent=1 // pred_region
      _
    $region21: #{lstm_cnn_tagger_forward.1} parent=1 // pred_fallthru
      _
    // Predicated region
    $region22: #{lstm_cnn_tagger_forward.1} parent=1 // pred_check
      _
    $region23: #{lstm_cnn_tagger_forward.1} parent=1 // pred_check_branch
      %29 = sbr.rel (0) target = $region25
    $region24: #{lstm_cnn_tagger_forward.1} parent=1 // pred_region
      _
    $region25: #{lstm_cnn_tagger_forward.1} parent=1 // pred_fallthru
      _
    // Predicated region
    $region26: #{lstm_cnn_tagger_forward.1} parent=1 // pred_check
      _
    $region27: #{lstm_cnn_tagger_forward.1} parent=1 // pred_check_branch
      %31 = sbr.rel (0) target = $region29
    $region28: #{lstm_cnn_tagger_forward.1} parent=1 // pred_region
      _
    $region29: #{lstm_cnn_tagger_forward.1} parent=1 // pred_fallthru
      _
    // Predicated region
    $region30: #{lstm_cnn_tagger_forward.1} parent=1 // pred_check
      _
    $region31: #{lstm_cnn_tagger_forward.1} parent=1 // pred_check_branch
      %33 = sbr.rel (0) target = $region33
    $region32: #{lstm_cnn_tagger_forward.1} parent=1 // pred_region
      _
    $region33: #{lstm_cnn_tagger_forward.1} parent=1 // pred_fallthru
      _
    // Predicated region
    $region34: #{lstm_cnn_tagger_forward.1} parent=1 // pred_check
      _
    $region35: #{lstm_cnn_tagger_forward.1} parent=1 // pred_check_branch
      %35 = sbr.rel (0) target = $region37
    $region36: #{lstm_cnn_tagger_forward.1} parent=1 // pred_region
      _
    $region37: #{lstm_cnn_tagger_forward.1} parent=1 // pred_fallthru
      _
    // Predicated region
    $region38: #{lstm_cnn_tagger_forward.1} parent=1 // pred_check
      _
    $region39: #{lstm_cnn_tagger_forward.1} parent=1 // pred_check_branch
      %37 = sbr.rel (0) target = $region41
    $region40: #{lstm_cnn_tagger_forward.1} parent=1 // pred_region
      _
    $region41: #{lstm_cnn_tagger_forward.1} parent=1 // pred_fallthru
      _
    // Predicated region
    $region42: #{lstm_cnn_tagger_forward.1} parent=1 // pred_check
      _
    $region43: #{lstm_cnn_tagger_forward.1} parent=1 // pred_check_branch
      %39 = sbr.rel (0) target = $region45
    $region44: #{lstm_cnn_tagger_forward.1} parent=1 // pred_region
      _
    $region45: #{lstm_cnn_tagger_forward.1} parent=1 // pred_fallthru
      _
    // Predicated region
    $region46: #{lstm_cnn_tagger_forward.1} parent=1 // pred_check
      _
    $region47: #{lstm_cnn_tagger_forward.1} parent=1 // pred_check_branch
      %41 = sbr.rel (0) target = $region49
    $region48: #{lstm_cnn_tagger_forward.1} parent=1 // pred_region
      _
    $region49: #{lstm_cnn_tagger_forward.1} parent=1 // pred_fallthru
      _
    %v42 = vld [vmem:[%s0] sm:$0xff]
    %v43 = vld [vmem:[%s0 + $0x8] sm:$0xff]
    %v44 = vld [vmem:[%s0 + $0x10] sm:$0xff]
    %v45 = vld [vmem:[%s0 + $0x18] sm:$0xff]
    %v46 = vld [vmem:[%s0 + $0x20] sm:$0xff]
    %v47 = vld [vmem:[%s0 + $0x28] sm:$0xff]
    %v48 = vld [vmem:[%s0 + $0x30] sm:$0xff]
    %v49 = vld [vmem:[%s0 + $0x38] sm:$0xff]
    %v50 = vld [vmem:[%s0 + $0x40] sm:$0xff]
    %v51 = vld [vmem:[%s0 + $0x48] sm:$0xff]
    %v52 = vld [vmem:[%s0 + $0x50] sm:$0xff]
    %v53 = vld [vmem:[%s0 + $0x58] sm:$0xff]
    %v54 = vld [vmem:[%s0 + $0x60] sm:$0xff]
    %v55 = vld [vmem:[%s0 + $0x68] sm:$0xff]
    %v56 = vld [vmem:[%s0 + $0x70] sm:$0xff]
    %v57 = vld [vmem:[%s0 + $0x78] sm:$0xff]
    %v58 = vld [vmem:[%s0 + $0x80] sm:$0xff]
    %v59 = vld [vmem:[%s0 + $0x88] sm:$0xff]
    %v60 = vld [vmem:[%s0 + $0x90] sm:$0xff]
    %v61 = vld [vmem:[%s0 + $0x98] sm:$0xff]
    %v62 = vld [vmem:[%s0 + $0xa0] sm:$0xff]
    %v63 = vld [vmem:[%s0 + $0xa8] sm:$0xff]
    %v64 = vld [vmem:[%s0 + $0xb0] sm:$0xff]
    %v65 = vld [vmem:[%s0 + $0xb8] sm:$0xff]
    %v66 = vld [vmem:[%s0 + $0xc0] sm:$0xff]
    %v67 = vld [vmem:[%s0 + $0xc8] sm:$0xff]
    %v68 = vld [vmem:[%s0 + $0xd0] sm:$0xff]
    %v69 = vld [vmem:[%s0 + $0xd8] sm:$0xff]
    %v70 = vld [vmem:[%s0 + $0xe0] sm:$0xff]
    %v71 = vld [vmem:[%s0 + $0xe8] sm:$0xff]
    %v72 = vld [vmem:[%s0 + $0xf0] sm:$0xff]
    %v73 = vld [vmem:[%s0 + $0xf8] sm:$0xff]
    %v74 = vld [vmem:[%s0 + $0x100] sm:$0xff]
    %v75 = vld [vmem:[%s0 + $0x108] sm:$0xff]
    %v76 = vld [vmem:[%s0 + $0x110] sm:$0xff]
    %v77 = vld [vmem:[%s0 + $0x118] sm:$0xff]
    %v78 = vld [vmem:[%s0 + $0x120] sm:$0xff]
    %v79 = vld [vmem:[%s0 + $0x128] sm:$0xff]
    %v80 = vld [vmem:[%s0 + $0x130] sm:$0xff]
    %v81 = vld [vmem:[%s0 + $0x138] sm:$0xff]
    %v82 = vld [vmem:[%s0 + $0x140] sm:$0xff]
    %v83 = vld [vmem:[%s0 + $0x148] sm:$0xff]
    %v84 = vld [vmem:[%s0 + $0x150] sm:$0xff]
    %v85 = vld [vmem:[%s0 + $0x158] sm:$0xff]
    %v86 = vld [vmem:[%s0 + $0x160] sm:$0xff]
    %v87 = vld [vmem:[%s0 + $0x168] sm:$0xff]
    %v88 = vld [vmem:[%s0 + $0x170] sm:$0xff]
    %v89 = vld [vmem:[%s0 + $0x178] sm:$0xff]
    %v90 = vld [vmem:[%s0 + $0x180] sm:$0xff]
    %v91 = vld [vmem:[%s0 + $0x188] sm:$0xff]
    %v92 = vld [vmem:[%s0 + $0x190] sm:$0xff]
    %v93 = vld [vmem:[%s0 + $0x198] sm:$0xff]
    %v94 = vld [vmem:[%s0 + $0x1a0] sm:$0xff]
    %v95 = vld [vmem:[%s0 + $0x1a8] sm:$0xff]
    %v96 = vld [vmem:[%s0 + $0x1b0] sm:$0xff]
    %v97 = vld [vmem:[%s0 + $0x1b8] sm:$0xff]
    %v98 = vld [vmem:[%s0 + $0x1c0] sm:$0xff]
    %v99 = vld [vmem:[%s0 + $0x1c8] sm:$0xff]
    %v100 = vld [vmem:[%s0 + $0x1d0] sm:$0xff]
    %v101 = vld [vmem:[%s0 + $0x1d8] sm:$0xff]
    %v102 = vld [vmem:[%s0 + $0x1e0] sm:$0xff]
    %v103 = vld [vmem:[%s0 + $0x1e8] sm:$0xff]
    %v104 = vld [vmem:[%s0 + $0x1f0] sm:$0xff]
    %v105 = vld [vmem:[%s0 + $0x1f8] sm:$0xff]
    %v106 = vld [vmem:[%s0 + $0x200] sm:$0xff]
    %v107 = vld [vmem:[%s0 + $0x208] sm:$0xff]
    %v108 = vld [vmem:[%s0 + $0x210] sm:$0xff]
    %v109 = vld [vmem:[%s0 + $0x218] sm:$0xff]
    %v110 = vld [vmem:[%s0 + $0x220] sm:$0xff]
    %v111 = vld [vmem:[%s0 + $0x228] sm:$0xff]
    %v112 = vld [vmem:[%s0 + $0x230] sm:$0xff]
    %v113 = vld [vmem:[%s0 + $0x238] sm:$0xff]
    %v114 = vld [vmem:[%s0 + $0x240] sm:$0xff]
    %v115 = vld [vmem:[%s0 + $0x248] sm:$0xff]
    %v116 = vld [vmem:[%s0 + $0x250] sm:$0xff]
    %v117 = vld [vmem:[%s0 + $0x258] sm:$0xff]
    %v118 = vld [vmem:[%s0 + $0x260] sm:$0xff]
    %v119 = vld [vmem:[%s0 + $0x268] sm:$0xff]
    %v120 = vld [vmem:[%s0 + $0x270] sm:$0xff]
    %v121 = vld [vmem:[%s0 + $0x278] sm:$0xff]
    %v122 = vld [vmem:[%s0 + $0x280] sm:$0xff]
    %v123 = vld [vmem:[%s0 + $0x288] sm:$0xff]
    %v124 = vld [vmem:[%s0 + $0x290] sm:$0xff]
    %v125 = vld [vmem:[%s0 + $0x298] sm:$0xff]
    %v126 = vld [vmem:[%s0 + $0x2a0] sm:$0xff]
    %v127 = vld [vmem:[%s0 + $0x2a8] sm:$0xff]
    %v128 = vld [vmem:[%s0 + $0x2b0] sm:$0xff]
    %v129 = vld [vmem:[%s0 + $0x2b8] sm:$0xff]
    %v130 = vld [vmem:[%s0 + $0x2c0] sm:$0xff]
    %v131 = vld [vmem:[%s0 + $0x2c8] sm:$0xff]
    %v132 = vld [vmem:[%s0 + $0x2d0] sm:$0xff]
    %v133 = vld [vmem:[%s0 + $0x2d8] sm:$0xff]
    %v134 = vld [vmem:[%s0 + $0x2e0] sm:$0xff]
    %v135 = vld [vmem:[%s0 + $0x2e8] sm:$0xff]
    %v136 = vld [vmem:[%s0 + $0x2f0] sm:$0xff]
    %v137 = vld [vmem:[%s0 + $0x2f8] sm:$0xff]
    %v138 = vld [vmem:[%s0 + $0x300] sm:$0xff]
    %v139 = vld [vmem:[%s0 + $0x308] sm:$0xff]
    %v140 = vld [vmem:[%s0 + $0x310] sm:$0xff]
    %v141 = vld [vmem:[%s0 + $0x318] sm:$0xff]
    %v142 = vld [vmem:[%s0 + $0x320] sm:$0xff]
    %v143 = vld [vmem:[%s0 + $0x328] sm:$0xff]
    %v144 = vld [vmem:[%s0 + $0x330] sm:$0xff]
    %v145 = vld [vmem:[%s0 + $0x338] sm:$0xff]
    %v146 = vld [vmem:[%s0 + $0x340] sm:$0xff]
    %v147 = vld [vmem:[%s0 + $0x348] sm:$0xff]
    %v148 = vld [vmem:[%s0 + $0x350] sm:$0xff]
    %v149 = vld [vmem:[%s0 + $0x358] sm:$0xff]
    %v150 = vld [vmem:[%s0 + $0x360] sm:$0xff]
    %v151 = vld [vmem:[%s0 + $0x368] sm:$0xff]
    %v152 = vld [vmem:[%s0 + $0x370] sm:$0xff]
    %v153 = vld [vmem:[%s0 + $0x378] sm:$0xff]
    %v154 = vld [vmem:[%s0 + $0x380] sm:$0xff]
    %v155 = vld [vmem:[%s0 + $0x388] sm:$0xff]
    %v156 = vld [vmem:[%s0 + $0x390] sm:$0xff]
    %v157 = vld [vmem:[%s0 + $0x398] sm:$0xff]
    %v158 = vld [vmem:[%s0 + $0x3a0] sm:$0xff]
    %v159 = vld [vmem:[%s0 + $0x3a8] sm:$0xff]
    %v160 = vld [vmem:[%s0 + $0x3b0] sm:$0xff]
    %v161 = vld [vmem:[%s0 + $0x3b8] sm:$0xff]
    %v162 = vld [vmem:[%s0 + $0x3c0] sm:$0xff]
    %v163 = vld [vmem:[%s0 + $0x3c8] sm:$0xff]
    %v164 = vld [vmem:[%s0 + $0x3d0] sm:$0xff]
    %v165 = vld [vmem:[%s0 + $0x3d8] sm:$0xff]
    %v166 = vld [vmem:[%s0 + $0x3e0] sm:$0xff]
    %v167 = vld [vmem:[%s0 + $0x3e8] sm:$0xff]
    %v168 = vld [vmem:[%s0 + $0x3f0] sm:$0xff]
    %v169 = vld [vmem:[%s0 + $0x3f8] sm:$0xff]
    %v170 = vld [vmem:[%s0 + $0x400] sm:$0xff]
    %v171 = vld [vmem:[%s0 + $0x408] sm:$0xff]
    %v172 = vld [vmem:[%s0 + $0x410] sm:$0xff]
    %v173 = vld [vmem:[%s0 + $0x418] sm:$0xff]
    %v174 = vld [vmem:[%s0 + $0x420] sm:$0xff]
    %v175 = vld [vmem:[%s0 + $0x428] sm:$0xff]
    %v176 = vld [vmem:[%s0 + $0x430] sm:$0xff]
    %v177 = vld [vmem:[%s0 + $0x438] sm:$0xff]
    %v178 = vld [vmem:[%s0 + $0x440] sm:$0xff]
    %v179 = vld [vmem:[%s0 + $0x448] sm:$0xff]
    %v180 = vld [vmem:[%s0 + $0x450] sm:$0xff]
    %v181 = vld [vmem:[%s0 + $0x458] sm:$0xff]
    %v182 = vld [vmem:[%s0 + $0x460] sm:$0xff]
    %v183 = vld [vmem:[%s0 + $0x468] sm:$0xff]
    %v184 = vld [vmem:[%s0 + $0x470] sm:$0xff]
    %v185 = vld [vmem:[%s0 + $0x478] sm:$0xff]
    %v186 = vld [vmem:[%s1] sm:$0xff]
    %v187 = vld [vmem:[%s1 + $0x8] sm:$0xff]
    %v188 = vld [vmem:[%s1 + $0x10] sm:$0xff]
    %v189 = vld [vmem:[%s1 + $0x18] sm:$0xff]
    %v190 = vld [vmem:[%s2] sm:$0x1]
    %v192 = vlaneseq
    %v193 = vshrl.u32 %v192, 7
    %v194 = vsub.s32 0, %v193
    %v195 = vrot.slane %v190, %v194
    %vm197 = vcmask 261120
    %v199 = vsel %vm197, %v42, 0
    %v202 = vsel %vm197, %v43, 0
    %v205 = vsel %vm197, %v44, 0
    %v208 = vsel %vm197, %v45, 0
    %v211 = vsel %vm197, %v46, 0
    %v214 = vsel %vm197, %v47, 0
    %v217 = vsel %vm197, %v48, 0
    %v220 = vsel %vm197, %v49, 0
    %v223 = vsel %vm197, %v50, 0
    %v226 = vsel %vm197, %v51, 0
    %v229 = vsel %vm197, %v52, 0
    %v232 = vsel %vm197, %v53, 0
    %v235 = vsel %vm197, %v54, 0
    %v238 = vsel %vm197, %v55, 0
    %v241 = vsel %vm197, %v56, 0
    %v244 = vsel %vm197, %v57, 0
    %v247 = vsel %vm197, %v58, 0
    %v250 = vsel %vm197, %v59, 0
    %v253 = vsel %vm197, %v60, 0
    %v256 = vsel %vm197, %v61, 0
    %v259 = vsel %vm197, %v62, 0
    %v262 = vsel %vm197, %v63, 0
    %v265 = vsel %vm197, %v64, 0
    %v268 = vsel %vm197, %v65, 0
    %v271 = vsel %vm197, %v66, 0
    %v274 = vsel %vm197, %v67, 0
    %v277 = vsel %vm197, %v68, 0
    %v280 = vsel %vm197, %v69, 0
    %v283 = vsel %vm197, %v70, 0
    %v286 = vsel %vm197, %v71, 0
    %v289 = vsel %vm197, %v72, 0
    %v292 = vsel %vm197, %v73, 0
    %v295 = vsel %vm197, %v74, 0
    %v298 = vsel %vm197, %v75, 0
    %v301 = vsel %vm197, %v76, 0
    %v304 = vsel %vm197, %v77, 0
    %v307 = vsel %vm197, %v78, 0
    %v310 = vsel %vm197, %v79, 0
    %v313 = vsel %vm197, %v80, 0
    %v316 = vsel %vm197, %v81, 0
    %v319 = vsel %vm197, %v82, 0
    %v322 = vsel %vm197, %v83, 0
    %v325 = vsel %vm197, %v84, 0
    %v328 = vsel %vm197, %v85, 0
    %v331 = vsel %vm197, %v86, 0
    %v334 = vsel %vm197, %v87, 0
    %v337 = vsel %vm197, %v88, 0
    %v340 = vsel %vm197, %v89, 0
    %v343 = vsel %vm197, %v90, 0
    %v346 = vsel %vm197, %v91, 0
    %v349 = vsel %vm197, %v92, 0
    %v352 = vsel %vm197, %v93, 0
    %v355 = vsel %vm197, %v94, 0
    %v358 = vsel %vm197, %v95, 0
    %v361 = vsel %vm197, %v96, 0
    %v364 = vsel %vm197, %v97, 0
    %v367 = vsel %vm197, %v98, 0
    %v370 = vsel %vm197, %v99, 0
    %v373 = vsel %vm197, %v100, 0
    %v376 = vsel %vm197, %v101, 0
    %v379 = vsel %vm197, %v102, 0
    %v382 = vsel %vm197, %v103, 0
    %v385 = vsel %vm197, %v104, 0
    %v388 = vsel %vm197, %v105, 0
    %v391 = vsel %vm197, %v106, 0
    %v394 = vsel %vm197, %v107, 0
    %v397 = vsel %vm197, %v108, 0
    %v400 = vsel %vm197, %v109, 0
    %v403 = vsel %vm197, %v110, 0
    %v406 = vsel %vm197, %v111, 0
    %v409 = vsel %vm197, %v112, 0
    %v412 = vsel %vm197, %v113, 0
    %v415 = vsel %vm197, %v114, 0
    %v418 = vsel %vm197, %v115, 0
    %v421 = vsel %vm197, %v116, 0
    %v424 = vsel %vm197, %v117, 0
    %v427 = vsel %vm197, %v118, 0
    %v430 = vsel %vm197, %v119, 0
    %v433 = vsel %vm197, %v120, 0
    %v436 = vsel %vm197, %v121, 0
    %v439 = vsel %vm197, %v122, 0
    %v442 = vsel %vm197, %v123, 0
    %v445 = vsel %vm197, %v124, 0
    %v448 = vsel %vm197, %v125, 0
    %v451 = vsel %vm197, %v126, 0
    %v454 = vsel %vm197, %v127, 0
    %v457 = vsel %vm197, %v128, 0
    %v460 = vsel %vm197, %v129, 0
    %v463 = vsel %vm197, %v130, 0
    %v466 = vsel %vm197, %v131, 0
    %v469 = vsel %vm197, %v132, 0
    %v472 = vsel %vm197, %v133, 0
    %v475 = vsel %vm197, %v134, 0
    %v478 = vsel %vm197, %v135, 0
    %v481 = vsel %vm197, %v136, 0
    %v484 = vsel %vm197, %v137, 0
    %v487 = vsel %vm197, %v138, 0
    %v490 = vsel %vm197, %v139, 0
    %v493 = vsel %vm197, %v140, 0
    %v496 = vsel %vm197, %v141, 0
    %v499 = vsel %vm197, %v142, 0
    %v502 = vsel %vm197, %v143, 0
    %v505 = vsel %vm197, %v144, 0
    %v508 = vsel %vm197, %v145, 0
    %v511 = vsel %vm197, %v146, 0
    %v514 = vsel %vm197, %v147, 0
    %v517 = vsel %vm197, %v148, 0
    %v520 = vsel %vm197, %v149, 0
    %v523 = vsel %vm197, %v150, 0
    %v526 = vsel %vm197, %v151, 0
    %v529 = vsel %vm197, %v152, 0
    %v532 = vsel %vm197, %v153, 0
    %v535 = vsel %vm197, %v154, 0
    %v538 = vsel %vm197, %v155, 0
    %v541 = vsel %vm197, %v156, 0
    %v544 = vsel %vm197, %v157, 0
    %v547 = vsel %vm197, %v158, 0
    %v550 = vsel %vm197, %v159, 0
    %v553 = vsel %vm197, %v160, 0
    %v556 = vsel %vm197, %v161, 0
    %v559 = vsel %vm197, %v162, 0
    %v562 = vsel %vm197, %v163, 0
    %v565 = vsel %vm197, %v164, 0
    %v568 = vsel %vm197, %v165, 0
    %v571 = vsel %vm197, %v166, 0
    %v574 = vsel %vm197, %v167, 0
    %v577 = vsel %vm197, %v168, 0
    %v580 = vsel %vm197, %v169, 0
    %v583 = vsel %vm197, %v170, 0
    %v586 = vsel %vm197, %v171, 0
    %v589 = vsel %vm197, %v172, 0
    %v592 = vsel %vm197, %v173, 0
    %v595 = vsel %vm197, %v174, 0
    %v598 = vsel %vm197, %v175, 0
    %v601 = vsel %vm197, %v176, 0
    %v604 = vsel %vm197, %v177, 0
    %v607 = vsel %vm197, %v178, 0
    %v610 = vsel %vm197, %v179, 0
    %v613 = vsel %vm197, %v180, 0
    %v616 = vsel %vm197, %v181, 0
    %v619 = vsel %vm197, %v182, 0
    %v622 = vsel %vm197, %v183, 0
    %v625 = vsel %vm197, %v184, 0
    %v628 = vsel %vm197, %v185, 0
    %630 = vmatprep.subr.mxu0 0.0
    %631 = vmatpush1.msra.mxu0 %v186
    %632 = vmatprep.subr.mxu0 0.0
    %633 = vmatpush1.msra.mxu0 %v187
    %634 = vmatprep.subr.mxu0 0.0
    %635 = vmatpush1.msra.mxu0 %v188
    %636 = vmatprep.subr.mxu0 0.0
    %637 = vmatpush1.msra.mxu0 %v189
    %638 = vmatprep.subr.mxu0 0.0
    %639 = vmatpush1.msra.mxu0 0.0
    %640 = vmatprep.subr.mxu0 0.0
    %641 = vmatpush1.msra.mxu0 0.0
    %642 = vmatprep.subr.mxu0 0.0
    %643 = vmatpush1.msra.mxu0 0.0
    %644 = vmatprep.subr.mxu0 0.0
    %645 = vmatpush1.msra.mxu0 0.0
    %646 = vmatprep.subr.mxu0 0.0
    %647 = vmatpush1.msra.mxu0 0.0
    %648 = vmatprep.subr.mxu0 0.0
    %649 = vmatpush1.msra.mxu0 0.0
    %650 = vmatprep.subr.mxu0 0.0
    %651 = vmatpush1.msra.mxu0 0.0
    %652 = vmatprep.subr.mxu0 0.0
    %653 = vmatpush1.msra.mxu0 0.0
    %654 = vmatprep.subr.mxu0 0.0
    %655 = vmatpush1.msra.mxu0 0.0
    %656 = vmatprep.subr.mxu0 0.0
    %657 = vmatpush1.msra.mxu0 0.0
    %658 = vmatprep.subr.mxu0 0.0
    %659 = vmatpush1.msra.mxu0 0.0
    %660 = vmatprep.subr.mxu0 0.0
    %661 = vmatpush1.msra.mxu0 0.0
    %662 = vmatprep.subr.mxu0 0.0
    %663 = vmatpush1.msra.mxu0 0.0
    %664 = vmatprep.subr.mxu0 0.0
    %665 = vmatpush1.msra.mxu0 0.0
    %666 = vmatprep.subr.mxu0 0.0
    %667 = vmatpush1.msra.mxu0 0.0
    %668 = vmatprep.subr.mxu0 0.0
    %669 = vmatpush1.msra.mxu0 0.0
    %670 = vmatprep.subr.mxu0 0.0
    %671 = vmatpush1.msra.mxu0 0.0
    %672 = vmatprep.subr.mxu0 0.0
    %673 = vmatpush1.msra.mxu0 0.0
    %674 = vmatprep.subr.mxu0 0.0
    %675 = vmatpush1.msra.mxu0 0.0
    %676 = vmatprep.subr.mxu0 0.0
    %677 = vmatpush1.msra.mxu0 0.0
    %678 = vmatprep.subr.mxu0 0.0
    %679 = vmatpush1.msra.mxu0 0.0
    %680 = vmatprep.subr.mxu0 0.0
    %681 = vmatpush1.msra.mxu0 0.0
    %682 = vmatprep.subr.mxu0 0.0
    %683 = vmatpush1.msra.mxu0 0.0
    %684 = vmatprep.subr.mxu0 0.0
    %685 = vmatpush1.msra.mxu0 0.0
    %686 = vmatprep.subr.mxu0 0.0
    %687 = vmatpush1.msra.mxu0 0.0
    %688 = vmatprep.subr.mxu0 0.0
    %689 = vmatpush1.msra.mxu0 0.0
    %690 = vmatprep.subr.mxu0 0.0
    %691 = vmatpush1.msra.mxu0 0.0
    %692 = vmatprep.subr.mxu0 0.0
    %693 = vmatpush1.msra.mxu0 0.0
    %694 = vmatprep.mubr.f32.mxu0 0.0
    %695 = vmatmul.mubr.f32.gmra.mrb[0].mxu0 %v199
    %v696 = vpop.f32.mrb[0].mxu0
    %v697 = vadd.f32 %v195, %v696
    %v698 = vpop.f32.mrb[0].mxu0
    %699 = vmatprep.mubr.f32.mxu0 0.0
    %700 = vmatmul.mubr.f32.gmra.mrb[0].mxu0 %v202
    %v701 = vpop.f32.mrb[0].mxu0
    %v702 = vadd.f32 %v195, %v701
    %v703 = vpop.f32.mrb[0].mxu0
    %704 = vmatprep.mubr.f32.mxu0 0.0
    %705 = vmatmul.mubr.f32.gmra.mrb[0].mxu0 %v205
    %v706 = vpop.f32.mrb[0].mxu0
    %v707 = vadd.f32 %v195, %v706
    %v708 = vpop.f32.mrb[0].mxu0
    %709 = vmatprep.mubr.f32.mxu0 0.0
    %710 = vmatmul.mubr.f32.gmra.mrb[0].mxu0 %v208
    %v711 = vpop.f32.mrb[0].mxu0
    %v712 = vadd.f32 %v195, %v711
    %v713 = vpop.f32.mrb[0].mxu0
    %714 = vmatprep.mubr.f32.mxu0 0.0
    %715 = vmatmul.mubr.f32.gmra.mrb[0].mxu0 %v211
    %v716 = vpop.f32.mrb[0].mxu0
    %v717 = vpop.f32.mrb[0].mxu0
    %718 = vmatprep.mubr.f32.mxu0 0.0
    %719 = vmatmul.mubr.f32.gmra.mrb[0].mxu0 %v214
    %v720 = vpop.f32.mrb[0].mxu0
    %v721 = vpop.f32.mrb[0].mxu0
    %722 = vmatprep.mubr.f32.mxu0 0.0
    %723 = vmatmul.mubr.f32.gmra.mrb[0].mxu0 %v217
    %v724 = vpop.f32.mrb[0].mxu0
    %v725 = vadd.f32 %v195, %v724
    %v726 = vpop.f32.mrb[0].mxu0
    %727 = vmatprep.mubr.f32.mxu0 0.0
    %728 = vmatmul.mubr.f32.gmra.mrb[0].mxu0 %v220
    %v729 = vpop.f32.mrb[0].mxu0
    %v730 = vadd.f32 %v195, %v729
    %v731 = vpop.f32.mrb[0].mxu0
    %732 = vmatprep.mubr.f32.mxu0 0.0
    %733 = vmatmul.mubr.f32.gmra.mrb[0].mxu0 %v223
    %v734 = vpop.f32.mrb[0].mxu0
    %v735 = vadd.f32 %v195, %v734
    %v736 = vpop.f32.mrb[0].mxu0
    %737 = vmatprep.mubr.f32.mxu0 0.0
    %738 = vmatmul.mubr.f32.gmra.mrb[0].mxu0 %v226
    %v739 = vpop.f32.mrb[0].mxu0
    %v740 = vadd.f32 %v195, %v739
    %v741 = vpop.f32.mrb[0].mxu0
    %742 = vmatprep.mubr.f32.mxu0 0.0
    %743 = vmatmul.mubr.f32.gmra.mrb[0].mxu0 %v229
    %v744 = vpop.f32.mrb[0].mxu0
    %v745 = vpop.f32.mrb[0].mxu0
    %746 = vmatprep.mubr.f32.mxu0 0.0
    %747 = vmatmul.mubr.f32.gmra.mrb[0].mxu0 %v232
    %v748 = vpop.f32.mrb[0].mxu0
    %v749 = vpop.f32.mrb[0].mxu0
    %750 = vmatprep.mubr.f32.mxu0 0.0
    %751 = vmatmul.mubr.f32.gmra.mrb[0].mxu0 %v235
    %v752 = vpop.f32.mrb[0].mxu0
    %v753 = vadd.f32 %v195, %v752
    %v754 = vpop.f32.mrb[0].mxu0
    %755 = vmatprep.mubr.f32.mxu0 0.0
    %756 = vmatmul.mubr.f32.gmra.mrb[0].mxu0 %v238
    %v757 = vpop.f32.mrb[0].mxu0
    %v758 = vadd.f32 %v195, %v757
    %v759 = vpop.f32.mrb[0].mxu0
    %760 = vmatprep.mubr.f32.mxu0 0.0
    %761 = vmatmul.mubr.f32.gmra.mrb[0].mxu0 %v241
    %v762 = vpop.f32.mrb[0].mxu0
    %v763 = vadd.f32 %v195, %v762
    %v764 = vpop.f32.mrb[0].mxu0
    %765 = vmatprep.mubr.f32.mxu0 0.0
    %766 = vmatmul.mubr.f32.gmra.mrb[0].mxu0 %v244
    %v767 = vpop.f32.mrb[0].mxu0
    %v768 = vadd.f32 %v195, %v767
    %v769 = vpop.f32.mrb[0].mxu0
    %770 = vmatprep.mubr.f32.mxu0 0.0
    %771 = vmatmul.mubr.f32.gmra.mrb[0].mxu0 %v247
    %v772 = vpop.f32.mrb[0].mxu0
    %v773 = vpop.f32.mrb[0].mxu0
    %774 = vmatprep.mubr.f32.mxu0 0.0
    %775 = vmatmul.mubr.f32.gmra.mrb[0].mxu0 %v250
    %v776 = vpop.f32.mrb[0].mxu0
    %v777 = vpop.f32.mrb[0].mxu0
    %778 = vmatprep.mubr.f32.mxu0 0.0
    %779 = vmatmul.mubr.f32.gmra.mrb[0].mxu0 %v253
    %v780 = vpop.f32.mrb[0].mxu0
    %v781 = vadd.f32 %v195, %v780
    %v782 = vpop.f32.mrb[0].mxu0
    %783 = vmatprep.mubr.f32.mxu0 0.0
    %784 = vmatmul.mubr.f32.gmra.mrb[0].mxu0 %v256
    %v785 = vpop.f32.mrb[0].mxu0
    %v786 = vadd.f32 %v195, %v785
    %v787 = vpop.f32.mrb[0].mxu0
    %788 = vmatprep.mubr.f32.mxu0 0.0
    %789 = vmatmul.mubr.f32.gmra.mrb[0].mxu0 %v259
    %v790 = vpop.f32.mrb[0].mxu0
    %v791 = vadd.f32 %v195, %v790
    %v792 = vpop.f32.mrb[0].mxu0
    %793 = vmatprep.mubr.f32.mxu0 0.0
    %794 = vmatmul.mubr.f32.gmra.mrb[0].mxu0 %v262
    %v795 = vpop.f32.mrb[0].mxu0
    %v796 = vadd.f32 %v195, %v795
    %v797 = vpop.f32.mrb[0].mxu0
    %798 = vmatprep.mubr.f32.mxu0 0.0
    %799 = vmatmul.mubr.f32.gmra.mrb[0].mxu0 %v265
    %v800 = vpop.f32.mrb[0].mxu0
    %v801 = vpop.f32.mrb[0].mxu0
    %802 = vmatprep.mubr.f32.mxu0 0.0
    %803 = vmatmul.mubr.f32.gmra.mrb[0].mxu0 %v268
    %v804 = vpop.f32.mrb[0].mxu0
    %v805 = vpop.f32.mrb[0].mxu0
    %806 = vmatprep.mubr.f32.mxu0 0.0
    %807 = vmatmul.mubr.f32.gmra.mrb[0].mxu0 %v271
    %v808 = vpop.f32.mrb[0].mxu0
    %v809 = vpop.f32.mrb[0].mxu0
    %810 = vmatprep.mubr.f32.mxu0 0.0
    %811 = vmatmul.mubr.f32.gmra.mrb[0].mxu0 %v274
    %v812 = vpop.f32.mrb[0].mxu0
    %v813 = vpop.f32.mrb[0].mxu0
    %814 = vmatprep.mubr.f32.mxu0 0.0
    %815 = vmatmul.mubr.f32.gmra.mrb[0].mxu0 %v277
    %v816 = vpop.f32.mrb[0].mxu0
    %v817 = vpop.f32.mrb[0].mxu0
    %818 = vmatprep.mubr.f32.mxu0 0.0
    %819 = vmatmul.mubr.f32.gmra.mrb[0].mxu0 %v280
    %v820 = vpop.f32.mrb[0].mxu0
    %v821 = vpop.f32.mrb[0].mxu0
    %822 = vmatprep.mubr.f32.mxu0 0.0
    %823 = vmatmul.mubr.f32.gmra.mrb[0].mxu0 %v283
    %v824 = vpop.f32.mrb[0].mxu0
    %v825 = vpop.f32.mrb[0].mxu0
    %826 = vmatprep.mubr.f32.mxu0 0.0
    %827 = vmatmul.mubr.f32.gmra.mrb[0].mxu0 %v286
    %v828 = vpop.f32.mrb[0].mxu0
    %v829 = vpop.f32.mrb[0].mxu0
    %830 = vmatprep.mubr.f32.mxu0 0.0
    %831 = vmatmul.mubr.f32.gmra.mrb[0].mxu0 %v289
    %v832 = vpop.f32.mrb[0].mxu0
    %v833 = vpop.f32.mrb[0].mxu0
    %834 = vmatprep.mubr.f32.mxu0 0.0
    %835 = vmatmul.mubr.f32.gmra.mrb[0].mxu0 %v292
    %v836 = vpop.f32.mrb[0].mxu0
    %v837 = vpop.f32.mrb[0].mxu0
    %838 = vmatprep.mubr.f32.mxu0 0.0
    %839 = vmatmul.mubr.f32.gmra.mrb[0].mxu0 %v295
    %v840 = vpop.f32.mrb[0].mxu0
    %v841 = vpop.f32.mrb[0].mxu0
    %842 = vmatprep.mubr.f32.mxu0 0.0
    %843 = vmatmul.mubr.f32.gmra.mrb[0].mxu0 %v298
    %v844 = vpop.f32.mrb[0].mxu0
    %v845 = vpop.f32.mrb[0].mxu0
    %846 = vmatprep.mubr.f32.mxu0 0.0
    %847 = vmatmul.mubr.f32.gmra.mrb[0].mxu0 %v301
    %v848 = vpop.f32.mrb[0].mxu0
    %v849 = vpop.f32.mrb[0].mxu0
    %850 = vmatprep.mubr.f32.mxu0 0.0
    %851 = vmatmul.mubr.f32.gmra.mrb[0].mxu0 %v304
    %v852 = vpop.f32.mrb[0].mxu0
    %v853 = vpop.f32.mrb[0].mxu0
    %854 = vmatprep.mubr.f32.mxu0 0.0
    %855 = vmatmul.mubr.f32.gmra.mrb[0].mxu0 %v307
    %v856 = vpop.f32.mrb[0].mxu0
    %v857 = vadd.f32 %v195, %v856
    %v858 = vpop.f32.mrb[0].mxu0
    %859 = vmatprep.mubr.f32.mxu0 0.0
    %860 = vmatmul.mubr.f32.gmra.mrb[0].mxu0 %v310
    %v861 = vpop.f32.mrb[0].mxu0
    %v862 = vadd.f32 %v195, %v861
    %v863 = vpop.f32.mrb[0].mxu0
    %864 = vmatprep.mubr.f32.mxu0 0.0
    %865 = vmatmul.mubr.f32.gmra.mrb[0].mxu0 %v313
    %v866 = vpop.f32.mrb[0].mxu0
    %v867 = vadd.f32 %v195, %v866
    %v868 = vpop.f32.mrb[0].mxu0
    %869 = vmatprep.mubr.f32.mxu0 0.0
    %870 = vmatmul.mubr.f32.gmra.mrb[0].mxu0 %v316
    %v871 = vpop.f32.mrb[0].mxu0
    %v872 = vadd.f32 %v195, %v871
    %v873 = vpop.f32.mrb[0].mxu0
    %874 = vmatprep.mubr.f32.mxu0 0.0
    %875 = vmatmul.mubr.f32.gmra.mrb[0].mxu0 %v319
    %v876 = vpop.f32.mrb[0].mxu0
    %v877 = vpop.f32.mrb[0].mxu0
    %878 = vmatprep.mubr.f32.mxu0 0.0
    %879 = vmatmul.mubr.f32.gmra.mrb[0].mxu0 %v322
    %v880 = vpop.f32.mrb[0].mxu0
    %v881 = vpop.f32.mrb[0].mxu0
    %882 = vmatprep.mubr.f32.mxu0 0.0
    %883 = vmatmul.mubr.f32.gmra.mrb[0].mxu0 %v325
    %v884 = vpop.f32.mrb[0].mxu0
    %v885 = vadd.f32 %v195, %v884
    %v886 = vpop.f32.mrb[0].mxu0
    %887 = vmatprep.mubr.f32.mxu0 0.0
    %888 = vmatmul.mubr.f32.gmra.mrb[0].mxu0 %v328
    %v889 = vpop.f32.mrb[0].mxu0
    %v890 = vadd.f32 %v195, %v889
    %v891 = vpop.f32.mrb[0].mxu0
    %892 = vmatprep.mubr.f32.mxu0 0.0
    %893 = vmatmul.mubr.f32.gmra.mrb[0].mxu0 %v331
    %v894 = vpop.f32.mrb[0].mxu0
    %v895 = vadd.f32 %v195, %v894
    %v896 = vpop.f32.mrb[0].mxu0
    %897 = vmatprep.mubr.f32.mxu0 0.0
    %898 = vmatmul.mubr.f32.gmra.mrb[0].mxu0 %v334
    %v899 = vpop.f32.mrb[0].mxu0
    %v900 = vadd.f32 %v195, %v899
    %v901 = vpop.f32.mrb[0].mxu0
    %902 = vmatprep.mubr.f32.mxu0 0.0
    %903 = vmatmul.mubr.f32.gmra.mrb[0].mxu0 %v337
    %v904 = vpop.f32.mrb[0].mxu0
    %v905 = vpop.f32.mrb[0].mxu0
    %906 = vmatprep.mubr.f32.mxu0 0.0
    %907 = vmatmul.mubr.f32.gmra.mrb[0].mxu0 %v340
    %v908 = vpop.f32.mrb[0].mxu0
    %v909 = vpop.f32.mrb[0].mxu0
    %910 = vmatprep.mubr.f32.mxu0 0.0
    %911 = vmatmul.mubr.f32.gmra.mrb[0].mxu0 %v343
    %v912 = vpop.f32.mrb[0].mxu0
    %v913 = vadd.f32 %v195, %v912
    %v914 = vpop.f32.mrb[0].mxu0
    %915 = vmatprep.mubr.f32.mxu0 0.0
    %916 = vmatmul.mubr.f32.gmra.mrb[0].mxu0 %v346
    %v917 = vpop.f32.mrb[0].mxu0
    %v918 = vadd.f32 %v195, %v917
    %v919 = vpop.f32.mrb[0].mxu0
    %920 = vmatprep.mubr.f32.mxu0 0.0
    %921 = vmatmul.mubr.f32.gmra.mrb[0].mxu0 %v349
    %v922 = vpop.f32.mrb[0].mxu0
    %v923 = vadd.f32 %v195, %v922
    %v924 = vpop.f32.mrb[0].mxu0
    %925 = vmatprep.mubr.f32.mxu0 0.0
    %926 = vmatmul.mubr.f32.gmra.mrb[0].mxu0 %v352
    %v927 = vpop.f32.mrb[0].mxu0
    %v928 = vadd.f32 %v195, %v927
    %v929 = vpop.f32.mrb[0].mxu0
    %930 = vmatprep.mubr.f32.mxu0 0.0
    %931 = vmatmul.mubr.f32.gmra.mrb[0].mxu0 %v355
    %v932 = vpop.f32.mrb[0].mxu0
    %v933 = vpop.f32.mrb[0].mxu0
    %934 = vmatprep.mubr.f32.mxu0 0.0
    %935 = vmatmul.mubr.f32.gmra.mrb[0].mxu0 %v358
    %v936 = vpop.f32.mrb[0].mxu0
    %v937 = vpop.f32.mrb[0].mxu0
    %938 = vmatprep.mubr.f32.mxu0 0.0
    %939 = vmatmul.mubr.f32.gmra.mrb[0].mxu0 %v361
    %v940 = vpop.f32.mrb[0].mxu0
    %v941 = vadd.f32 %v195, %v940
    %v942 = vpop.f32.mrb[0].mxu0
    %943 = vmatprep.mubr.f32.mxu0 0.0
    %944 = vmatmul.mubr.f32.gmra.mrb[0].mxu0 %v364
    %v945 = vpop.f32.mrb[0].mxu0
    %v946 = vadd.f32 %v195, %v945
    %v947 = vpop.f32.mrb[0].mxu0
    %948 = vmatprep.mubr.f32.mxu0 0.0
    %949 = vmatmul.mubr.f32.gmra.mrb[0].mxu0 %v367
    %v950 = vpop.f32.mrb[0].mxu0
    %v951 = vadd.f32 %v195, %v950
    %v952 = vpop.f32.mrb[0].mxu0
    %953 = vmatprep.mubr.f32.mxu0 0.0
    %954 = vmatmul.mubr.f32.gmra.mrb[0].mxu0 %v370
    %v955 = vpop.f32.mrb[0].mxu0
    %v956 = vadd.f32 %v195, %v955
    %v957 = vpop.f32.mrb[0].mxu0
    %958 = vmatprep.mubr.f32.mxu0 0.0
    %959 = vmatmul.mubr.f32.gmra.mrb[0].mxu0 %v373
    %v960 = vpop.f32.mrb[0].mxu0
    %v961 = vpop.f32.mrb[0].mxu0
    %962 = vmatprep.mubr.f32.mxu0 0.0
    %963 = vmatmul.mubr.f32.gmra.mrb[0].mxu0 %v376
    %v964 = vpop.f32.mrb[0].mxu0
    %v965 = vpop.f32.mrb[0].mxu0
    %966 = vmatprep.mubr.f32.mxu0 0.0
    %967 = vmatmul.mubr.f32.gmra.mrb[0].mxu0 %v379
    %v968 = vpop.f32.mrb[0].mxu0
    %v969 = vpop.f32.mrb[0].mxu0
    %970 = vmatprep.mubr.f32.mxu0 0.0
    %971 = vmatmul.mubr.f32.gmra.mrb[0].mxu0 %v382
    %v972 = vpop.f32.mrb[0].mxu0
    %v973 = vpop.f32.mrb[0].mxu0
    %974 = vmatprep.mubr.f32.mxu0 0.0
    %975 = vmatmul.mubr.f32.gmra.mrb[0].mxu0 %v385
    %v976 = vpop.f32.mrb[0].mxu0
    %v977 = vpop.f32.mrb[0].mxu0
    %978 = vmatprep.mubr.f32.mxu0 0.0
    %979 = vmatmul.mubr.f32.gmra.mrb[0].mxu0 %v388
    %v980 = vpop.f32.mrb[0].mxu0
    %v981 = vpop.f32.mrb[0].mxu0
    %982 = vmatprep.mubr.f32.mxu0 0.0
    %983 = vmatmul.mubr.f32.gmra.mrb[0].mxu0 %v391
    %v984 = vpop.f32.mrb[0].mxu0
    %v985 = vpop.f32.mrb[0].mxu0
    %986 = vmatprep.mubr.f32.mxu0 0.0
    %987 = vmatmul.mubr.f32.gmra.mrb[0].mxu0 %v394
    %v988 = vpop.f32.mrb[0].mxu0
    %v989 = vpop.f32.mrb[0].mxu0
    %990 = vmatprep.mubr.f32.mxu0 0.0
    %991 = vmatmul.mubr.f32.gmra.mrb[0].mxu0 %v397
    %v992 = vpop.f32.mrb[0].mxu0
    %v993 = vpop.f32.mrb[0].mxu0
    %994 = vmatprep.mubr.f32.mxu0 0.0
    %995 = vmatmul.mubr.f32.gmra.mrb[0].mxu0 %v400
    %v996 = vpop.f32.mrb[0].mxu0
    %v997 = vpop.f32.mrb[0].mxu0
    %998 = vmatprep.mubr.f32.mxu0 0.0
    %999 = vmatmul.mubr.f32.gmra.mrb[0].mxu0 %v403
    %v1000 = vpop.f32.mrb[0].mxu0
    %v1001 = vpop.f32.mrb[0].mxu0
    %1002 = vmatprep.mubr.f32.mxu0 0.0
    %1003 = vmatmul.mubr.f32.gmra.mrb[0].mxu0 %v406
    %v1004 = vpop.f32.mrb[0].mxu0
    %v1005 = vpop.f32.mrb[0].mxu0
    %1006 = vmatprep.mubr.f32.mxu0 0.0
    %1007 = vmatmul.mubr.f32.gmra.mrb[0].mxu0 %v409
    %v1008 = vpop.f32.mrb[0].mxu0
    %v1009 = vpop.f32.mrb[0].mxu0
    %1010 = vmatprep.mubr.f32.mxu0 0.0
    %1011 = vmatmul.mubr.f32.gmra.mrb[0].mxu0 %v412
    %v1012 = vpop.f32.mrb[0].mxu0
    %v1013 = vpop.f32.mrb[0].mxu0
    %1014 = vmatprep.mubr.f32.mxu0 0.0
    %1015 = vmatmul.mubr.f32.gmra.mrb[0].mxu0 %v415
    %v1016 = vpop.f32.mrb[0].mxu0
    %v1017 = vadd.f32 %v195, %v1016
    %v1018 = vpop.f32.mrb[0].mxu0
    %1019 = vmatprep.mubr.f32.mxu0 0.0
    %1020 = vmatmul.mubr.f32.gmra.mrb[0].mxu0 %v418
    %v1021 = vpop.f32.mrb[0].mxu0
    %v1022 = vadd.f32 %v195, %v1021
    %v1023 = vpop.f32.mrb[0].mxu0
    %1024 = vmatprep.mubr.f32.mxu0 0.0
    %1025 = vmatmul.mubr.f32.gmra.mrb[0].mxu0 %v421
    %v1026 = vpop.f32.mrb[0].mxu0
    %v1027 = vadd.f32 %v195, %v1026
    %v1028 = vpop.f32.mrb[0].mxu0
    %1029 = vmatprep.mubr.f32.mxu0 0.0
    %1030 = vmatmul.mubr.f32.gmra.mrb[0].mxu0 %v424
    %v1031 = vpop.f32.mrb[0].mxu0
    %v1032 = vadd.f32 %v195, %v1031
    %v1033 = vpop.f32.mrb[0].mxu0
    %1034 = vmatprep.mubr.f32.mxu0 0.0
    %1035 = vmatmul.mubr.f32.gmra.mrb[0].mxu0 %v427
    %v1036 = vpop.f32.mrb[0].mxu0
    %v1037 = vpop.f32.mrb[0].mxu0
    %1038 = vmatprep.mubr.f32.mxu0 0.0
    %1039 = vmatmul.mubr.f32.gmra.mrb[0].mxu0 %v430
    %v1040 = vpop.f32.mrb[0].mxu0
    %v1041 = vpop.f32.mrb[0].mxu0
    %1042 = vmatprep.mubr.f32.mxu0 0.0
    %1043 = vmatmul.mubr.f32.gmra.mrb[0].mxu0 %v433
    %v1044 = vpop.f32.mrb[0].mxu0
    %v1045 = vadd.f32 %v195, %v1044
    %v1046 = vpop.f32.mrb[0].mxu0
    %1047 = vmatprep.mubr.f32.mxu0 0.0
    %1048 = vmatmul.mubr.f32.gmra.mrb[0].mxu0 %v436
    %v1049 = vpop.f32.mrb[0].mxu0
    %v1050 = vadd.f32 %v195, %v1049
    %v1051 = vpop.f32.mrb[0].mxu0
    %1052 = vmatprep.mubr.f32.mxu0 0.0
    %1053 = vmatmul.mubr.f32.gmra.mrb[0].mxu0 %v439
    %v1054 = vpop.f32.mrb[0].mxu0
    %v1055 = vadd.f32 %v195, %v1054
    %v1056 = vpop.f32.mrb[0].mxu0
    %1057 = vmatprep.mubr.f32.mxu0 0.0
    %1058 = vmatmul.mubr.f32.gmra.mrb[0].mxu0 %v442
    %v1059 = vpop.f32.mrb[0].mxu0
    %v1060 = vadd.f32 %v195, %v1059
    %v1061 = vpop.f32.mrb[0].mxu0
    %1062 = vmatprep.mubr.f32.mxu0 0.0
    %1063 = vmatmul.mubr.f32.gmra.mrb[0].mxu0 %v445
    %v1064 = vpop.f32.mrb[0].mxu0
    %v1065 = vpop.f32.mrb[0].mxu0
    %1066 = vmatprep.mubr.f32.mxu0 0.0
    %1067 = vmatmul.mubr.f32.gmra.mrb[0].mxu0 %v448
    %v1068 = vpop.f32.mrb[0].mxu0
    %v1069 = vpop.f32.mrb[0].mxu0
    %1070 = vmatprep.mubr.f32.mxu0 0.0
    %1071 = vmatmul.mubr.f32.gmra.mrb[0].mxu0 %v451
    %v1072 = vpop.f32.mrb[0].mxu0
    %v1073 = vadd.f32 %v195, %v1072
    %v1074 = vpop.f32.mrb[0].mxu0
    %1075 = vmatprep.mubr.f32.mxu0 0.0
    %1076 = vmatmul.mubr.f32.gmra.mrb[0].mxu0 %v454
    %v1077 = vpop.f32.mrb[0].mxu0
    %v1078 = vadd.f32 %v195, %v1077
    %v1079 = vpop.f32.mrb[0].mxu0
    %1080 = vmatprep.mubr.f32.mxu0 0.0
    %1081 = vmatmul.mubr.f32.gmra.mrb[0].mxu0 %v457
    %v1082 = vpop.f32.mrb[0].mxu0
    %v1083 = vadd.f32 %v195, %v1082
    %v1084 = vpop.f32.mrb[0].mxu0
    %1085 = vmatprep.mubr.f32.mxu0 0.0
    %1086 = vmatmul.mubr.f32.gmra.mrb[0].mxu0 %v460
    %v1087 = vpop.f32.mrb[0].mxu0
    %v1088 = vadd.f32 %v195, %v1087
    %v1089 = vpop.f32.mrb[0].mxu0
    %1090 = vmatprep.mubr.f32.mxu0 0.0
    %1091 = vmatmul.mubr.f32.gmra.mrb[0].mxu0 %v463
    %v1092 = vpop.f32.mrb[0].mxu0
    %v1093 = vpop.f32.mrb[0].mxu0
    %1094 = vmatprep.mubr.f32.mxu0 0.0
    %1095 = vmatmul.mubr.f32.gmra.mrb[0].mxu0 %v466
    %v1096 = vpop.f32.mrb[0].mxu0
    %v1097 = vpop.f32.mrb[0].mxu0
    %1098 = vmatprep.mubr.f32.mxu0 0.0
    %1099 = vmatmul.mubr.f32.gmra.mrb[0].mxu0 %v469
    %v1100 = vpop.f32.mrb[0].mxu0
    %v1101 = vadd.f32 %v195, %v1100
    %v1102 = vpop.f32.mrb[0].mxu0
    %1103 = vmatprep.mubr.f32.mxu0 0.0
    %1104 = vmatmul.mubr.f32.gmra.mrb[0].mxu0 %v472
    %v1105 = vpop.f32.mrb[0].mxu0
    %v1106 = vadd.f32 %v195, %v1105
    %v1107 = vpop.f32.mrb[0].mxu0
    %1108 = vmatprep.mubr.f32.mxu0 0.0
    %1109 = vmatmul.mubr.f32.gmra.mrb[0].mxu0 %v475
    %v1110 = vpop.f32.mrb[0].mxu0
    %v1111 = vadd.f32 %v195, %v1110
    %v1112 = vpop.f32.mrb[0].mxu0
    %1113 = vmatprep.mubr.f32.mxu0 0.0
    %1114 = vmatmul.mubr.f32.gmra.mrb[0].mxu0 %v478
    %v1115 = vpop.f32.mrb[0].mxu0
    %v1116 = vadd.f32 %v195, %v1115
    %v1117 = vpop.f32.mrb[0].mxu0
    %1118 = vmatprep.mubr.f32.mxu0 0.0
    %1119 = vmatmul.mubr.f32.gmra.mrb[0].mxu0 %v481
    %v1120 = vpop.f32.mrb[0].mxu0
    %v1121 = vpop.f32.mrb[0].mxu0
    %1122 = vmatprep.mubr.f32.mxu0 0.0
    %1123 = vmatmul.mubr.f32.gmra.mrb[0].mxu0 %v484
    %v1124 = vpop.f32.mrb[0].mxu0
    %v1125 = vpop.f32.mrb[0].mxu0
    %1126 = vmatprep.mubr.f32.mxu0 0.0
    %1127 = vmatmul.mubr.f32.gmra.mrb[0].mxu0 %v487
    %v1128 = vpop.f32.mrb[0].mxu0
    %v1129 = vpop.f32.mrb[0].mxu0
    %1130 = vmatprep.mubr.f32.mxu0 0.0
    %1131 = vmatmul.mubr.f32.gmra.mrb[0].mxu0 %v490
    %v1132 = vpop.f32.mrb[0].mxu0
    %v1133 = vpop.f32.mrb[0].mxu0
    %1134 = vmatprep.mubr.f32.mxu0 0.0
    %1135 = vmatmul.mubr.f32.gmra.mrb[0].mxu0 %v493
    %v1136 = vpop.f32.mrb[0].mxu0
    %v1137 = vpop.f32.mrb[0].mxu0
    %1138 = vmatprep.mubr.f32.mxu0 0.0
    %1139 = vmatmul.mubr.f32.gmra.mrb[0].mxu0 %v496
    %v1140 = vpop.f32.mrb[0].mxu0
    %v1141 = vpop.f32.mrb[0].mxu0
    %1142 = vmatprep.mubr.f32.mxu0 0.0
    %1143 = vmatmul.mubr.f32.gmra.mrb[0].mxu0 %v499
    %v1144 = vpop.f32.mrb[0].mxu0
    %v1145 = vpop.f32.mrb[0].mxu0
    %1146 = vmatprep.mubr.f32.mxu0 0.0
    %1147 = vmatmul.mubr.f32.gmra.mrb[0].mxu0 %v502
    %v1148 = vpop.f32.mrb[0].mxu0
    %v1149 = vpop.f32.mrb[0].mxu0
    %1150 = vmatprep.mubr.f32.mxu0 0.0
    %1151 = vmatmul.mubr.f32.gmra.mrb[0].mxu0 %v505
    %v1152 = vpop.f32.mrb[0].mxu0
    %v1153 = vpop.f32.mrb[0].mxu0
    %1154 = vmatprep.mubr.f32.mxu0 0.0
    %1155 = vmatmul.mubr.f32.gmra.mrb[0].mxu0 %v508
    %v1156 = vpop.f32.mrb[0].mxu0
    %v1157 = vpop.f32.mrb[0].mxu0
    %1158 = vmatprep.mubr.f32.mxu0 0.0
    %1159 = vmatmul.mubr.f32.gmra.mrb[0].mxu0 %v511
    %v1160 = vpop.f32.mrb[0].mxu0
    %v1161 = vpop.f32.mrb[0].mxu0
    %1162 = vmatprep.mubr.f32.mxu0 0.0
    %1163 = vmatmul.mubr.f32.gmra.mrb[0].mxu0 %v514
    %v1164 = vpop.f32.mrb[0].mxu0
    %v1165 = vpop.f32.mrb[0].mxu0
    %1166 = vmatprep.mubr.f32.mxu0 0.0
    %1167 = vmatmul.mubr.f32.gmra.mrb[0].mxu0 %v517
    %v1168 = vpop.f32.mrb[0].mxu0
    %v1169 = vpop.f32.mrb[0].mxu0
    %1170 = vmatprep.mubr.f32.mxu0 0.0
    %1171 = vmatmul.mubr.f32.gmra.mrb[0].mxu0 %v520
    %v1172 = vpop.f32.mrb[0].mxu0
    %v1173 = vpop.f32.mrb[0].mxu0
    %1174 = vmatprep.mubr.f32.mxu0 0.0
    %1175 = vmatmul.mubr.f32.gmra.mrb[0].mxu0 %v523
    %v1176 = vpop.f32.mrb[0].mxu0
    %v1177 = vadd.f32 %v195, %v1176
    %v1178 = vpop.f32.mrb[0].mxu0
    %1179 = vmatprep.mubr.f32.mxu0 0.0
    %1180 = vmatmul.mubr.f32.gmra.mrb[0].mxu0 %v526
    %v1181 = vpop.f32.mrb[0].mxu0
    %v1182 = vadd.f32 %v195, %v1181
    %v1183 = vpop.f32.mrb[0].mxu0
    %1184 = vmatprep.mubr.f32.mxu0 0.0
    %1185 = vmatmul.mubr.f32.gmra.mrb[0].mxu0 %v529
    %v1186 = vpop.f32.mrb[0].mxu0
    %v1187 = vadd.f32 %v195, %v1186
    %v1188 = vpop.f32.mrb[0].mxu0
    %1189 = vmatprep.mubr.f32.mxu0 0.0
    %1190 = vmatmul.mubr.f32.gmra.mrb[0].mxu0 %v532
    %v1191 = vpop.f32.mrb[0].mxu0
    %v1192 = vadd.f32 %v195, %v1191
    %v1193 = vpop.f32.mrb[0].mxu0
    %1194 = vmatprep.mubr.f32.mxu0 0.0
    %1195 = vmatmul.mubr.f32.gmra.mrb[0].mxu0 %v535
    %v1196 = vpop.f32.mrb[0].mxu0
    %v1197 = vpop.f32.mrb[0].mxu0
    %1198 = vmatprep.mubr.f32.mxu0 0.0
    %1199 = vmatmul.mubr.f32.gmra.mrb[0].mxu0 %v538
    %v1200 = vpop.f32.mrb[0].mxu0
    %v1201 = vpop.f32.mrb[0].mxu0
    %1202 = vmatprep.mubr.f32.mxu0 0.0
    %1203 = vmatmul.mubr.f32.gmra.mrb[0].mxu0 %v541
    %v1204 = vpop.f32.mrb[0].mxu0
    %v1205 = vadd.f32 %v195, %v1204
    %v1206 = vpop.f32.mrb[0].mxu0
    %1207 = vmatprep.mubr.f32.mxu0 0.0
    %1208 = vmatmul.mubr.f32.gmra.mrb[0].mxu0 %v544
    %v1209 = vpop.f32.mrb[0].mxu0
    %v1210 = vadd.f32 %v195, %v1209
    %v1211 = vpop.f32.mrb[0].mxu0
    %1212 = vmatprep.mubr.f32.mxu0 0.0
    %1213 = vmatmul.mubr.f32.gmra.mrb[0].mxu0 %v547
    %v1214 = vpop.f32.mrb[0].mxu0
    %v1215 = vadd.f32 %v195, %v1214
    %v1216 = vpop.f32.mrb[0].mxu0
    %1217 = vmatprep.mubr.f32.mxu0 0.0
    %1218 = vmatmul.mubr.f32.gmra.mrb[0].mxu0 %v550
    %v1219 = vpop.f32.mrb[0].mxu0
    %v1220 = vadd.f32 %v195, %v1219
    %v1221 = vpop.f32.mrb[0].mxu0
    %1222 = vmatprep.mubr.f32.mxu0 0.0
    %1223 = vmatmul.mubr.f32.gmra.mrb[0].mxu0 %v553
    %v1224 = vpop.f32.mrb[0].mxu0
    %v1225 = vpop.f32.mrb[0].mxu0
    %1226 = vmatprep.mubr.f32.mxu0 0.0
    %1227 = vmatmul.mubr.f32.gmra.mrb[0].mxu0 %v556
    %v1228 = vpop.f32.mrb[0].mxu0
    %v1229 = vpop.f32.mrb[0].mxu0
    %1230 = vmatprep.mubr.f32.mxu0 0.0
    %1231 = vmatmul.mubr.f32.gmra.mrb[0].mxu0 %v559
    %v1232 = vpop.f32.mrb[0].mxu0
    %v1233 = vadd.f32 %v195, %v1232
    %v1234 = vpop.f32.mrb[0].mxu0
    %1235 = vmatprep.mubr.f32.mxu0 0.0
    %1236 = vmatmul.mubr.f32.gmra.mrb[0].mxu0 %v562
    %v1237 = vpop.f32.mrb[0].mxu0
    %v1238 = vadd.f32 %v195, %v1237
    %v1239 = vpop.f32.mrb[0].mxu0
    %1240 = vmatprep.mubr.f32.mxu0 0.0
    %1241 = vmatmul.mubr.f32.gmra.mrb[0].mxu0 %v565
    %v1242 = vpop.f32.mrb[0].mxu0
    %v1243 = vadd.f32 %v195, %v1242
    %v1244 = vpop.f32.mrb[0].mxu0
    %1245 = vmatprep.mubr.f32.mxu0 0.0
    %1246 = vmatmul.mubr.f32.gmra.mrb[0].mxu0 %v568
    %v1247 = vpop.f32.mrb[0].mxu0
    %v1248 = vadd.f32 %v195, %v1247
    %v1249 = vpop.f32.mrb[0].mxu0
    %1250 = vmatprep.mubr.f32.mxu0 0.0
    %1251 = vmatmul.mubr.f32.gmra.mrb[0].mxu0 %v571
    %v1252 = vpop.f32.mrb[0].mxu0
    %v1253 = vpop.f32.mrb[0].mxu0
    %1254 = vmatprep.mubr.f32.mxu0 0.0
    %1255 = vmatmul.mubr.f32.gmra.mrb[0].mxu0 %v574
    %v1256 = vpop.f32.mrb[0].mxu0
    %v1257 = vpop.f32.mrb[0].mxu0
    %1258 = vmatprep.mubr.f32.mxu0 0.0
    %1259 = vmatmul.mubr.f32.gmra.mrb[0].mxu0 %v577
    %v1260 = vpop.f32.mrb[0].mxu0
    %v1261 = vadd.f32 %v195, %v1260
    %v1262 = vpop.f32.mrb[0].mxu0
    %1263 = vmatprep.mubr.f32.mxu0 0.0
    %1264 = vmatmul.mubr.f32.gmra.mrb[0].mxu0 %v580
    %v1265 = vpop.f32.mrb[0].mxu0
    %v1266 = vadd.f32 %v195, %v1265
    %v1267 = vpop.f32.mrb[0].mxu0
    %1268 = vmatprep.mubr.f32.mxu0 0.0
    %1269 = vmatmul.mubr.f32.gmra.mrb[0].mxu0 %v583
    %v1270 = vpop.f32.mrb[0].mxu0
    %v1271 = vadd.f32 %v195, %v1270
    %v1272 = vpop.f32.mrb[0].mxu0
    %1273 = vmatprep.mubr.f32.mxu0 0.0
    %1274 = vmatmul.mubr.f32.gmra.mrb[0].mxu0 %v586
    %v1275 = vpop.f32.mrb[0].mxu0
    %v1276 = vadd.f32 %v195, %v1275
    %v1277 = vpop.f32.mrb[0].mxu0
    %1278 = vmatprep.mubr.f32.mxu0 0.0
    %1279 = vmatmul.mubr.f32.gmra.mrb[0].mxu0 %v589
    %v1280 = vpop.f32.mrb[0].mxu0
    %v1281 = vpop.f32.mrb[0].mxu0
    %1282 = vmatprep.mubr.f32.mxu0 0.0
    %1283 = vmatmul.mubr.f32.gmra.mrb[0].mxu0 %v592
    %v1284 = vpop.f32.mrb[0].mxu0
    %v1285 = vpop.f32.mrb[0].mxu0
    %1286 = vmatprep.mubr.f32.mxu0 0.0
    %1287 = vmatmul.mubr.f32.gmra.mrb[0].mxu0 %v595
    %v1288 = vpop.f32.mrb[0].mxu0
    %v1289 = vpop.f32.mrb[0].mxu0
    %1290 = vmatprep.mubr.f32.mxu0 0.0
    %1291 = vmatmul.mubr.f32.gmra.mrb[0].mxu0 %v598
    %v1292 = vpop.f32.mrb[0].mxu0
    %v1293 = vpop.f32.mrb[0].mxu0
    %1294 = vmatprep.mubr.f32.mxu0 0.0
    %1295 = vmatmul.mubr.f32.gmra.mrb[0].mxu0 %v601
    %v1296 = vpop.f32.mrb[0].mxu0
    %v1297 = vpop.f32.mrb[0].mxu0
    %1298 = vmatprep.mubr.f32.mxu0 0.0
    %1299 = vmatmul.mubr.f32.gmra.mrb[0].mxu0 %v604
    %v1300 = vpop.f32.mrb[0].mxu0
    %v1301 = vpop.f32.mrb[0].mxu0
    %1302 = vmatprep.mubr.f32.mxu0 0.0
    %1303 = vmatmul.mubr.f32.gmra.mrb[0].mxu0 %v607
    %v1304 = vpop.f32.mrb[0].mxu0
    %v1305 = vpop.f32.mrb[0].mxu0
    %1306 = vmatprep.mubr.f32.mxu0 0.0
    %1307 = vmatmul.mubr.f32.gmra.mrb[0].mxu0 %v610
    %v1308 = vpop.f32.mrb[0].mxu0
    %v1309 = vpop.f32.mrb[0].mxu0
    %1310 = vmatprep.mubr.f32.mxu0 0.0
    %1311 = vmatmul.mubr.f32.gmra.mrb[0].mxu0 %v613
    %v1312 = vpop.f32.mrb[0].mxu0
    %v1313 = vpop.f32.mrb[0].mxu0
    %1314 = vmatprep.mubr.f32.mxu0 0.0
    %1315 = vmatmul.mubr.f32.gmra.mrb[0].mxu0 %v616
    %v1316 = vpop.f32.mrb[0].mxu0
    %v1317 = vpop.f32.mrb[0].mxu0
    %1318 = vmatprep.mubr.f32.mxu0 0.0
    %1319 = vmatmul.mubr.f32.gmra.mrb[0].mxu0 %v619
    %v1320 = vpop.f32.mrb[0].mxu0
    %v1321 = vpop.f32.mrb[0].mxu0
    %1322 = vmatprep.mubr.f32.mxu0 0.0
    %1323 = vmatmul.mubr.f32.gmra.mrb[0].mxu0 %v622
    %v1324 = vpop.f32.mrb[0].mxu0
    %v1325 = vpop.f32.mrb[0].mxu0
    %1326 = vmatprep.mubr.f32.mxu0 0.0
    %1327 = vmatmul.mubr.f32.gmra.mrb[0].mxu0 %v625
    %v1328 = vpop.f32.mrb[0].mxu0
    %v1329 = vpop.f32.mrb[0].mxu0
    %1330 = vmatprep.mubr.f32.mxu0 0.0
    %1331 = vmatmul.mubr.f32.gmra.mrb[0].mxu0 %v628
    %v1332 = vpop.f32.mrb[0].mxu0
    %v1333 = vpop.f32.mrb[0].mxu0
    %1334 = vdwg.mxu0
    %v1335 = vmax.f32 %v697, %v857
    %v1336 = vmax.f32 %v702, %v862
    %v1337 = vmax.f32 %v707, %v867
    %v1338 = vmax.f32 %v712, %v872
    %v1339 = vmax.f32 %v725, %v885
    %v1340 = vmax.f32 %v730, %v890
    %v1341 = vmax.f32 %v735, %v895
    %v1342 = vmax.f32 %v740, %v900
    %v1343 = vmax.f32 %v753, %v913
    %v1344 = vmax.f32 %v758, %v918
    %v1345 = vmax.f32 %v763, %v923
    %v1346 = vmax.f32 %v768, %v928
    %v1347 = vmax.f32 %v781, %v941
    %v1348 = vmax.f32 %v786, %v946
    %v1349 = vmax.f32 %v791, %v951
    %v1350 = vmax.f32 %v796, %v956
    %v1351 = vmax.f32 %v1017, %v1177
    %v1352 = vmax.f32 %v1022, %v1182
    %v1353 = vmax.f32 %v1027, %v1187
    %v1354 = vmax.f32 %v1032, %v1192
    %v1355 = vmax.f32 %v1045, %v1205
    %v1356 = vmax.f32 %v1050, %v1210
    %v1357 = vmax.f32 %v1055, %v1215
    %v1358 = vmax.f32 %v1060, %v1220
    %v1359 = vmax.f32 %v1073, %v1233
    %v1360 = vmax.f32 %v1078, %v1238
    %v1361 = vmax.f32 %v1083, %v1243
    %v1362 = vmax.f32 %v1088, %v1248
    %v1363 = vmax.f32 %v1101, %v1261
    %v1364 = vmax.f32 %v1106, %v1266
    %v1365 = vmax.f32 %v1111, %v1271
    %v1366 = vmax.f32 %v1116, %v1276
    %v1367 = vmax.f32 %v1335, %v1351
    %v1368 = vmax.f32 %v1336, %v1352
    %v1369 = vmax.f32 %v1337, %v1353
    %v1370 = vmax.f32 %v1338, %v1354
    %v1371 = vmax.f32 %v1339, %v1355
    %v1372 = vmax.f32 %v1340, %v1356
    %v1373 = vmax.f32 %v1341, %v1357
    %v1374 = vmax.f32 %v1342, %v1358
    %v1375 = vmax.f32 %v1343, %v1359
    %v1376 = vmax.f32 %v1344, %v1360
    %v1377 = vmax.f32 %v1345, %v1361
    %v1378 = vmax.f32 %v1346, %v1362
    %v1379 = vmax.f32 %v1347, %v1363
    %v1380 = vmax.f32 %v1348, %v1364
    %v1381 = vmax.f32 %v1349, %v1365
    %v1382 = vmax.f32 %v1350, %v1366
    %v1383 = vmax.f32 %v1367, 0.0
    %v1384 = vmax.f32 %v1368, 0.0
    %v1385 = vmax.f32 %v1369, 0.0
    %v1386 = vmax.f32 %v1370, 0.0
    %v1387 = vmax.f32 %v1371, 0.0
    %v1388 = vmax.f32 %v1372, 0.0
    %v1389 = vmax.f32 %v1373, 0.0
    %v1390 = vmax.f32 %v1374, 0.0
    %v1391 = vmax.f32 %v1375, 0.0
    %v1392 = vmax.f32 %v1376, 0.0
    %v1393 = vmax.f32 %v1377, 0.0
    %v1394 = vmax.f32 %v1378, 0.0
    %v1395 = vmax.f32 %v1379, 0.0
    %v1396 = vmax.f32 %v1380, 0.0
    %v1397 = vmax.f32 %v1381, 0.0
    %v1398 = vmax.f32 %v1382, 0.0
    %1403 = vrot.lane.b32.xlu0 %v1384, 32
    %v1404 = vpop.permute.xlu0 %1403
    %1405 = vrot.lane.b32.xlu0 %v1385, 32
    %v1406 = vpop.permute.xlu0 %1405
    %1407 = vrot.lane.b32.xlu0 %v1388, 32
    %v1408 = vpop.permute.xlu0 %1407
    %1409 = vrot.lane.b32.xlu0 %v1389, 32
    %v1410 = vpop.permute.xlu0 %1409
    %1417 = vrot.lane.b32.xlu0 %v1385, 64
    %v1418 = vpop.permute.xlu0 %1417
    %1419 = vrot.lane.b32.xlu0 %v1386, 64
    %v1420 = vpop.permute.xlu0 %1419
    %1421 = vrot.lane.b32.xlu0 %v1389, 64
    %v1422 = vpop.permute.xlu0 %1421
    %1423 = vrot.lane.b32.xlu0 %v1390, 64
    %v1424 = vpop.permute.xlu0 %1423
    %1432 = vrot.lane.b32.xlu0 %v1387, 96
    %v1433 = vpop.permute.xlu0 %1432
    %1434 = vrot.lane.b32.xlu0 %v1388, 96
    %v1435 = vpop.permute.xlu0 %1434
    %1436 = vrot.lane.b32.xlu0 %v1391, 96
    %v1437 = vpop.permute.xlu0 %1436
    %1438 = vrot.lane.b32.xlu0 %v1392, 96
    %v1439 = vpop.permute.xlu0 %1438
    %1446 = vrot.lane.b32.xlu0 %v1390, 32
    %v1447 = vpop.permute.xlu0 %1446
    %1448 = vrot.lane.b32.xlu0 %v1393, 32
    %v1449 = vpop.permute.xlu0 %1448
    %1450 = vrot.lane.b32.xlu0 %v1394, 32
    %v1451 = vpop.permute.xlu0 %1450
    %1457 = vrot.lane.b32.xlu0 %v1391, 64
    %v1458 = vpop.permute.xlu0 %1457
    %1459 = vrot.lane.b32.xlu0 %v1392, 64
    %v1460 = vpop.permute.xlu0 %1459
    %1461 = vrot.lane.b32.xlu0 %v1395, 64
    %v1462 = vpop.permute.xlu0 %1461
    %1463 = vrot.lane.b32.xlu0 %v1396, 64
    %v1464 = vpop.permute.xlu0 %1463
    %1470 = vrot.lane.b32.xlu0 %v1393, 96
    %v1471 = vpop.permute.xlu0 %1470
    %1472 = vrot.lane.b32.xlu0 %v1396, 96
    %v1473 = vpop.permute.xlu0 %1472
    %1474 = vrot.lane.b32.xlu0 %v1397, 96
    %v1475 = vpop.permute.xlu0 %1474
    %v1479 = vsel %vm197, %v1383, %v1404
    %v1480 = vsel %vm197, %v1384, %v1406
    %v1481 = vsel %vm197, %v1387, %v1408
    %v1482 = vsel %vm197, %v1388, %v1410
    %vm1483 = vcmask 523264
    %v1484 = vsel %vm1483, %v1479, %v1418
    %v1485 = vsel %vm1483, %v1480, %v1420
    %v1486 = vsel %vm1483, %v1481, %v1422
    %v1487 = vsel %vm1483, %v1482, %v1424
    %vm1488 = vcmask 785408
    %v1489 = vsel %vm1488, %v1484, %v1433
    %v1490 = vsel %vm1488, %v1485, %v1435
    %v1491 = vsel %vm1488, %v1486, %v1437
    %v1492 = vsel %vm1488, %v1487, %v1439
    %v1493 = vsel %vm197, %v1389, %v1447
    %v1494 = vsel %vm197, %v1392, %v1449
    %v1495 = vsel %vm197, %v1393, %v1451
    %v1496 = vsel %vm1483, %v1482, %v1458
    %v1497 = vsel %vm1483, %v1493, %v1460
    %v1498 = vsel %vm1483, %v1494, %v1462
    %v1499 = vsel %vm1483, %v1495, %v1464
    %v1500 = vsel %vm1488, %v1496, %v1439
    %v1501 = vsel %vm1488, %v1497, %v1471
    %v1502 = vsel %vm1488, %v1498, %v1473
    %v1503 = vsel %vm1488, %v1499, %v1475
    %v1504 = vld [vmem:[%s3] sm:$0xff]
    %v1505 = vld [vmem:[%s3 + $0x8] sm:$0xff]
    %v1506 = vld [vmem:[%s3 + $0x10] sm:$0xff]
    %v1507 = vld [vmem:[%s3 + $0x18] sm:$0xff]
    %v1508 = vld [vmem:[%s3 + $0x20] sm:$0xff]
    %v1509 = vld [vmem:[%s3 + $0x28] sm:$0xff]
    %v1510 = vld [vmem:[%s3 + $0x30] sm:$0xff]
    %v1511 = vld [vmem:[%s3 + $0x38] sm:$0xff]
    %v1512 = vld [vmem:[%s3 + $0x40] sm:$0xff]
    %v1513 = vld [vmem:[%s3 + $0x48] sm:$0xff]
    %v1514 = vld [vmem:[%s3 + $0x50] sm:$0xff]
    %v1515 = vld [vmem:[%s3 + $0x58] sm:$0xff]
    %v1516 = vld [vmem:[%s3 + $0x60] sm:$0xff]
    %v1517 = vld [vmem:[%s3 + $0x68] sm:$0xff]
    %v1518 = vld [vmem:[%s3 + $0x70] sm:$0xff]
    %v1519 = vld [vmem:[%s3 + $0x78] sm:$0xff]
    %v1520 = vld [vmem:[%s3 + $0x80] sm:$0xff]
    %v1521 = vld [vmem:[%s3 + $0x88] sm:$0xff]
    %v1522 = vld [vmem:[%s3 + $0x90] sm:$0xff]
    %v1523 = vld [vmem:[%s3 + $0x98] sm:$0xff]
    %v1524 = vld [vmem:[%s3 + $0xa0] sm:$0xff]
    %v1525 = vld [vmem:[%s3 + $0xa8] sm:$0xff]
    %v1526 = vld [vmem:[%s3 + $0xb0] sm:$0xff]
    %v1527 = vld [vmem:[%s3 + $0xb8] sm:$0xff]
    %v1528 = vld [vmem:[%s3 + $0xc0] sm:$0xff]
    %v1529 = vld [vmem:[%s3 + $0xc8] sm:$0xff]
    %v1530 = vld [vmem:[%s3 + $0xd0] sm:$0xff]
    %v1531 = vld [vmem:[%s3 + $0xd8] sm:$0xff]
    %v1532 = vld [vmem:[%s3 + $0xe0] sm:$0xff]
    %v1533 = vld [vmem:[%s3 + $0xe8] sm:$0xff]
    %v1534 = vld [vmem:[%s3 + $0xf0] sm:$0xff]
    %v1535 = vld [vmem:[%s3 + $0xf8] sm:$0xff]
    %v1536 = vld [vmem:[%s3 + $0x100] sm:$0xff]
    %v1537 = vld [vmem:[%s3 + $0x108] sm:$0xff]
    %v1538 = vld [vmem:[%s3 + $0x110] sm:$0xff]
    %v1539 = vld [vmem:[%s3 + $0x118] sm:$0xff]
    %v1540 = vld [vmem:[%s4] sm:$0x1]
    %v1542 = vlaneseq
    %v1543 = vshrl.u32 %v1542, 7
    %v1544 = vsub.s32 0, %v1543
    %v1545 = vrot.slane %v1540, %v1544
    %v1547 = vsel %vm197, %v1393, 0
    %v1549 = vsel %vm197, %v1394, 0
    %v1551 = vsel %vm197, %v1397, 0
    %v1554 = vsel %vm197, %v1398, 0
    %1556 = vmatprep.subr.mxu0 0.0
    %1557 = vmatpush1.msra.mxu0 %v1504
    %1558 = vmatprep.subr.mxu0 0.0
    %1559 = vmatpush1.msra.mxu0 %v1505
    %1560 = vmatprep.subr.mxu0 0.0
    %1561 = vmatpush1.msra.mxu0 %v1506
    %1562 = vmatprep.subr.mxu0 0.0
    %1563 = vmatpush1.msra.mxu0 %v1507
    %1564 = vmatprep.subr.mxu0 0.0
    %1565 = vmatpush1.msra.mxu0 %v1508
    %1566 = vmatprep.subr.mxu0 0.0
    %1567 = vmatpush1.msra.mxu0 %v1509
    %1568 = vmatprep.subr.mxu0 0.0
    %1569 = vmatpush1.msra.mxu0 %v1510
    %1570 = vmatprep.subr.mxu0 0.0
    %1571 = vmatpush1.msra.mxu0 %v1511
    %1572 = vmatprep.subr.mxu0 0.0
    %1573 = vmatpush1.msra.mxu0 %v1512
    %1574 = vmatprep.subr.mxu0 0.0
    %1575 = vmatpush1.msra.mxu0 %v1513
    %1576 = vmatprep.subr.mxu0 0.0
    %1577 = vmatpush1.msra.mxu0 %v1514
    %1578 = vmatprep.subr.mxu0 0.0
    %1579 = vmatpush1.msra.mxu0 %v1515
    %1580 = vmatprep.subr.mxu0 0.0
    %1581 = vmatpush1.msra.mxu0 %v1516
    %1582 = vmatprep.subr.mxu0 0.0
    %1583 = vmatpush1.msra.mxu0 %v1517
    %1584 = vmatprep.subr.mxu0 0.0
    %1585 = vmatpush1.msra.mxu0 %v1518
    %1586 = vmatprep.subr.mxu0 0.0
    %1587 = vmatpush1.msra.mxu0 %v1519
    %1588 = vmatprep.subr.mxu0 0.0
    %1589 = vmatpush1.msra.mxu0 %v1520
    %1590 = vmatprep.subr.mxu0 0.0
    %1591 = vmatpush1.msra.mxu0 %v1521
    %1592 = vmatprep.subr.mxu0 0.0
    %1593 = vmatpush1.msra.mxu0 %v1522
    %1594 = vmatprep.subr.mxu0 0.0
    %1595 = vmatpush1.msra.mxu0 %v1523
    %1596 = vmatprep.subr.mxu0 0.0
    %1597 = vmatpush1.msra.mxu0 %v1524
    %1598 = vmatprep.subr.mxu0 0.0
    %1599 = vmatpush1.msra.mxu0 %v1525
    %1600 = vmatprep.subr.mxu0 0.0
    %1601 = vmatpush1.msra.mxu0 %v1526
    %1602 = vmatprep.subr.mxu0 0.0
    %1603 = vmatpush1.msra.mxu0 %v1527
    %1604 = vmatprep.subr.mxu0 0.0
    %1605 = vmatpush1.msra.mxu0 %v1528
    %1606 = vmatprep.subr.mxu0 0.0
    %1607 = vmatpush1.msra.mxu0 %v1529
    %1608 = vmatprep.subr.mxu0 0.0
    %1609 = vmatpush1.msra.mxu0 %v1530
    %1610 = vmatprep.subr.mxu0 0.0
    %1611 = vmatpush1.msra.mxu0 %v1531
    %1612 = vmatprep.subr.mxu0 0.0
    %1613 = vmatpush1.msra.mxu0 %v1532
    %1614 = vmatprep.subr.mxu0 0.0
    %1615 = vmatpush1.msra.mxu0 %v1533
    %1616 = vmatprep.subr.mxu0 0.0
    %1617 = vmatpush1.msra.mxu0 %v1534
    %1618 = vmatprep.subr.mxu0 0.0
    %1619 = vmatpush1.msra.mxu0 %v1535
    %1620 = vmatprep.mubr.f32.mxu0 %v1500
    %1621 = vmatmul.mubr.f32.gmra.mrb[0].mxu0 %v1489
    %v1622 = vpop.f32.mrb[0].mxu0
    %v1623 = vadd.f32 %v1545, %v1622
    %v1624 = vpop.f32.mrb[0].mxu0
    %1625 = vmatprep.mubr.f32.mxu0 %v1501
    %1626 = vmatmul.mubr.f32.gmra.mrb[0].mxu0 %v1490
    %v1627 = vpop.f32.mrb[0].mxu0
    %v1628 = vadd.f32 %v1545, %v1627
    %v1629 = vpop.f32.mrb[0].mxu0
    %1630 = vmatprep.mubr.f32.mxu0 %v1502
    %1631 = vmatmul.mubr.f32.gmra.mrb[0].mxu0 %v1491
    %v1632 = vpop.f32.mrb[0].mxu0
    %v1633 = vadd.f32 %v1545, %v1632
    %v1634 = vpop.f32.mrb[0].mxu0
    %1635 = vmatprep.mubr.f32.mxu0 %v1503
    %1636 = vmatmul.mubr.f32.gmra.mrb[0].mxu0 %v1492
    %v1637 = vpop.f32.mrb[0].mxu0
    %v1638 = vadd.f32 %v1545, %v1637
    %v1639 = vpop.f32.mrb[0].mxu0
    %1640 = vdwg.mxu0
    %1641 = vmatprep.subr.mxu0 0.0
    %1642 = vmatpush1.msra.mxu0 %v1536
    %1643 = vmatprep.subr.mxu0 0.0
    %1644 = vmatpush1.msra.mxu0 %v1537
    %1645 = vmatprep.subr.mxu0 0.0
    %1646 = vmatpush1.msra.mxu0 %v1538
    %1647 = vmatprep.subr.mxu0 0.0
    %1648 = vmatpush1.msra.mxu0 %v1539
    %1649 = vmatprep.subr.mxu0 0.0
    %1650 = vmatpush1.msra.mxu0 0.0
    %1651 = vmatprep.subr.mxu0 0.0
    %1652 = vmatpush1.msra.mxu0 0.0
    %1653 = vmatprep.subr.mxu0 0.0
    %1654 = vmatpush1.msra.mxu0 0.0
    %1655 = vmatprep.subr.mxu0 0.0
    %1656 = vmatpush1.msra.mxu0 0.0
    %1657 = vmatprep.subr.mxu0 0.0
    %1658 = vmatpush1.msra.mxu0 0.0
    %1659 = vmatprep.subr.mxu0 0.0
    %1660 = vmatpush1.msra.mxu0 0.0
    %1661 = vmatprep.subr.mxu0 0.0
    %1662 = vmatpush1.msra.mxu0 0.0
    %1663 = vmatprep.subr.mxu0 0.0
    %1664 = vmatpush1.msra.mxu0 0.0
    %1665 = vmatprep.subr.mxu0 0.0
    %1666 = vmatpush1.msra.mxu0 0.0
    %1667 = vmatprep.subr.mxu0 0.0
    %1668 = vmatpush1.msra.mxu0 0.0
    %1669 = vmatprep.subr.mxu0 0.0
    %1670 = vmatpush1.msra.mxu0 0.0
    %1671 = vmatprep.subr.mxu0 0.0
    %1672 = vmatpush1.msra.mxu0 0.0
    %1673 = vmatprep.subr.mxu0 0.0
    %1674 = vmatpush1.msra.mxu0 0.0
    %1675 = vmatprep.subr.mxu0 0.0
    %1676 = vmatpush1.msra.mxu0 0.0
    %1677 = vmatprep.subr.mxu0 0.0
    %1678 = vmatpush1.msra.mxu0 0.0
    %1679 = vmatprep.subr.mxu0 0.0
    %1680 = vmatpush1.msra.mxu0 0.0
    %1681 = vmatprep.subr.mxu0 0.0
    %1682 = vmatpush1.msra.mxu0 0.0
    %1683 = vmatprep.subr.mxu0 0.0
    %1684 = vmatpush1.msra.mxu0 0.0
    %1685 = vmatprep.subr.mxu0 0.0
    %1686 = vmatpush1.msra.mxu0 0.0
    %1687 = vmatprep.subr.mxu0 0.0
    %1688 = vmatpush1.msra.mxu0 0.0
    %1689 = vmatprep.subr.mxu0 0.0
    %1690 = vmatpush1.msra.mxu0 0.0
    %1691 = vmatprep.subr.mxu0 0.0
    %1692 = vmatpush1.msra.mxu0 0.0
    %1693 = vmatprep.subr.mxu0 0.0
    %1694 = vmatpush1.msra.mxu0 0.0
    %1695 = vmatprep.subr.mxu0 0.0
    %1696 = vmatpush1.msra.mxu0 0.0
    %1697 = vmatprep.subr.mxu0 0.0
    %1698 = vmatpush1.msra.mxu0 0.0
    %1699 = vmatprep.subr.mxu0 0.0
    %1700 = vmatpush1.msra.mxu0 0.0
    %1701 = vmatprep.subr.mxu0 0.0
    %1702 = vmatpush1.msra.mxu0 0.0
    %1703 = vmatprep.subr.mxu0 0.0
    %1704 = vmatpush1.msra.mxu0 0.0
    %1705 = vmatprep.mubr.f32.mxu0 0.0
    %1706 = vmatmul.mubr.f32.gmra.mrb[0].mxu0 %v1547
    %v1707 = vpop.f32.mrb[0].mxu0
    %v1708 = vadd.f32 %v1623, %v1707
    %v1709 = vpop.f32.mrb[0].mxu0
    %1710 = vmatprep.mubr.f32.mxu0 0.0
    %1711 = vmatmul.mubr.f32.gmra.mrb[0].mxu0 %v1549
    %v1712 = vpop.f32.mrb[0].mxu0
    %v1713 = vadd.f32 %v1628, %v1712
    %v1714 = vpop.f32.mrb[0].mxu0
    %1715 = vmatprep.mubr.f32.mxu0 0.0
    %1716 = vmatmul.mubr.f32.gmra.mrb[0].mxu0 %v1551
    %v1717 = vpop.f32.mrb[0].mxu0
    %v1718 = vadd.f32 %v1633, %v1717
    %v1719 = vpop.f32.mrb[0].mxu0
    %1720 = vmatprep.mubr.f32.mxu0 0.0
    %1721 = vmatmul.mubr.f32.gmra.mrb[0].mxu0 %v1554
    %v1722 = vpop.f32.mrb[0].mxu0
    %v1723 = vadd.f32 %v1638, %v1722
    %v1724 = vpop.f32.mrb[0].mxu0
    %1725 = vdwg.mxu0
    %v1726 = vmax.f32 %v1708, %v1713
    %v1727 = vmax.f32 %v1718, %v1723
    %v1728 = vmax.f32 %v1726, %v1727
    %v1729 = vmax.f32 %v1728, 0.0
    %v1730 = vld [vmem:[%s6] sm:$0xff]
    %v1731 = vld [vmem:[%s5] sm:$0xff]
    %v1732 = vld [vmem:[%s7] sm:$0xff]
    %vm1733 = vcmask 64512
    %v1735 = vsel %vm1733, %v1731, 0
    %1737 = vmatprep.subr.mxu0 0.0
    %1738 = vmatpush1.msra.mxu0 %v1732
    %1739 = vmatprep.subr.mxu0 0.0
    %1740 = vmatpush1.msra.mxu0 0.0
    %1741 = vmatprep.subr.mxu0 0.0
    %1742 = vmatpush1.msra.mxu0 0.0
    %1743 = vmatprep.subr.mxu0 0.0
    %1744 = vmatpush1.msra.mxu0 0.0
    %1745 = vmatprep.subr.mxu0 0.0
    %1746 = vmatpush1.msra.mxu0 0.0
    %1747 = vmatprep.subr.mxu0 0.0
    %1748 = vmatpush1.msra.mxu0 0.0
    %1749 = vmatprep.subr.mxu0 0.0
    %1750 = vmatpush1.msra.mxu0 0.0
    %1751 = vmatprep.subr.mxu0 0.0
    %1752 = vmatpush1.msra.mxu0 0.0
    %1753 = vmatprep.subr.mxu0 0.0
    %1754 = vmatpush1.msra.mxu0 0.0
    %1755 = vmatprep.subr.mxu0 0.0
    %1756 = vmatpush1.msra.mxu0 0.0
    %1757 = vmatprep.subr.mxu0 0.0
    %1758 = vmatpush1.msra.mxu0 0.0
    %1759 = vmatprep.subr.mxu0 0.0
    %1760 = vmatpush1.msra.mxu0 0.0
    %1761 = vmatprep.subr.mxu0 0.0
    %1762 = vmatpush1.msra.mxu0 0.0
    %1763 = vmatprep.subr.mxu0 0.0
    %1764 = vmatpush1.msra.mxu0 0.0
    %1765 = vmatprep.subr.mxu0 0.0
    %1766 = vmatpush1.msra.mxu0 0.0
    %1767 = vmatprep.subr.mxu0 0.0
    %1768 = vmatpush1.msra.mxu0 0.0
    %1769 = vmatprep.subr.mxu0 0.0
    %1770 = vmatpush1.msra.mxu0 0.0
    %1771 = vmatprep.subr.mxu0 0.0
    %1772 = vmatpush1.msra.mxu0 0.0
    %1773 = vmatprep.subr.mxu0 0.0
    %1774 = vmatpush1.msra.mxu0 0.0
    %1775 = vmatprep.subr.mxu0 0.0
    %1776 = vmatpush1.msra.mxu0 0.0
    %1777 = vmatprep.subr.mxu0 0.0
    %1778 = vmatpush1.msra.mxu0 0.0
    %1779 = vmatprep.subr.mxu0 0.0
    %1780 = vmatpush1.msra.mxu0 0.0
    %1781 = vmatprep.subr.mxu0 0.0
    %1782 = vmatpush1.msra.mxu0 0.0
    %1783 = vmatprep.subr.mxu0 0.0
    %1784 = vmatpush1.msra.mxu0 0.0
    %1785 = vmatprep.subr.mxu0 0.0
    %1786 = vmatpush1.msra.mxu0 0.0
    %1787 = vmatprep.subr.mxu0 0.0
    %1788 = vmatpush1.msra.mxu0 0.0
    %1789 = vmatprep.subr.mxu0 0.0
    %1790 = vmatpush1.msra.mxu0 0.0
    %1791 = vmatprep.subr.mxu0 0.0
    %1792 = vmatpush1.msra.mxu0 0.0
    %1793 = vmatprep.subr.mxu0 0.0
    %1794 = vmatpush1.msra.mxu0 0.0
    %1795 = vmatprep.subr.mxu0 0.0
    %1796 = vmatpush1.msra.mxu0 0.0
    %1797 = vmatprep.subr.mxu0 0.0
    %1798 = vmatpush1.msra.mxu0 0.0
    %1799 = vmatprep.subr.mxu0 0.0
    %1800 = vmatpush1.msra.mxu0 0.0
    %1801 = vmatprep.mubr.f32.mxu0 0.0
    %1802 = vmatmul.mubr.f32.gmra.mrb[0].mxu0 %v1735
    %v1803 = vpop.f32.mrb[0].mxu0
    %v1804 = vadd.f32 0.0, %v1803
    %v1805 = vpop.f32.mrb[0].mxu0
    %1806 = vdwg.mxu0
    %v1808 = vsel %vm1733, %v1729, 0
    %1810 = vmatprep.subr.mxu0 0.0
    %1811 = vmatpush1.msra.mxu0 %v1730
    %1812 = vmatprep.subr.mxu0 0.0
    %1813 = vmatpush1.msra.mxu0 0.0
    %1814 = vmatprep.subr.mxu0 0.0
    %1815 = vmatpush1.msra.mxu0 0.0
    %1816 = vmatprep.subr.mxu0 0.0
    %1817 = vmatpush1.msra.mxu0 0.0
    %1818 = vmatprep.subr.mxu0 0.0
    %1819 = vmatpush1.msra.mxu0 0.0
    %1820 = vmatprep.subr.mxu0 0.0
    %1821 = vmatpush1.msra.mxu0 0.0
    %1822 = vmatprep.subr.mxu0 0.0
    %1823 = vmatpush1.msra.mxu0 0.0
    %1824 = vmatprep.subr.mxu0 0.0
    %1825 = vmatpush1.msra.mxu0 0.0
    %1826 = vmatprep.subr.mxu0 0.0
    %1827 = vmatpush1.msra.mxu0 0.0
    %1828 = vmatprep.subr.mxu0 0.0
    %1829 = vmatpush1.msra.mxu0 0.0
    %1830 = vmatprep.subr.mxu0 0.0
    %1831 = vmatpush1.msra.mxu0 0.0
    %1832 = vmatprep.subr.mxu0 0.0
    %1833 = vmatpush1.msra.mxu0 0.0
    %1834 = vmatprep.subr.mxu0 0.0
    %1835 = vmatpush1.msra.mxu0 0.0
    %1836 = vmatprep.subr.mxu0 0.0
    %1837 = vmatpush1.msra.mxu0 0.0
    %1838 = vmatprep.subr.mxu0 0.0
    %1839 = vmatpush1.msra.mxu0 0.0
    %1840 = vmatprep.subr.mxu0 0.0
    %1841 = vmatpush1.msra.mxu0 0.0
    %1842 = vmatprep.subr.mxu0 0.0
    %1843 = vmatpush1.msra.mxu0 0.0
    %1844 = vmatprep.subr.mxu0 0.0
    %1845 = vmatpush1.msra.mxu0 0.0
    %1846 = vmatprep.subr.mxu0 0.0
    %1847 = vmatpush1.msra.mxu0 0.0
    %1848 = vmatprep.subr.mxu0 0.0
    %1849 = vmatpush1.msra.mxu0 0.0
    %1850 = vmatprep.subr.mxu0 0.0
    %1851 = vmatpush1.msra.mxu0 0.0
    %1852 = vmatprep.subr.mxu0 0.0
    %1853 = vmatpush1.msra.mxu0 0.0
    %1854 = vmatprep.subr.mxu0 0.0
    %1855 = vmatpush1.msra.mxu0 0.0
    %1856 = vmatprep.subr.mxu0 0.0
    %1857 = vmatpush1.msra.mxu0 0.0
    %1858 = vmatprep.subr.mxu0 0.0
    %1859 = vmatpush1.msra.mxu0 0.0
    %1860 = vmatprep.subr.mxu0 0.0
    %1861 = vmatpush1.msra.mxu0 0.0
    %1862 = vmatprep.subr.mxu0 0.0
    %1863 = vmatpush1.msra.mxu0 0.0
    %1864 = vmatprep.subr.mxu0 0.0
    %1865 = vmatpush1.msra.mxu0 0.0
    %1866 = vmatprep.subr.mxu0 0.0
    %1867 = vmatpush1.msra.mxu0 0.0
    %1868 = vmatprep.subr.mxu0 0.0
    %1869 = vmatpush1.msra.mxu0 0.0
    %1870 = vmatprep.subr.mxu0 0.0
    %1871 = vmatpush1.msra.mxu0 0.0
    %1872 = vmatprep.subr.mxu0 0.0
    %1873 = vmatpush1.msra.mxu0 0.0
    %1874 = vmatprep.mubr.f32.mxu0 0.0
    %1875 = vmatmul.mubr.f32.gmra.mrb[0].mxu0 %v1808
    %v1876 = vpop.f32.mrb[0].mxu0
    %v1877 = vadd.f32 %v1804, %v1876
    %v1878 = vpop.f32.mrb[0].mxu0
    %1879 = vdwg.mxu0
    %v1880 = vld [vmem:[%s9] sm:$0x1]
    %v1882 = vlaneseq
    %v1883 = vshrl.u32 %v1882, 7
    %v1884 = vsub.s32 0, %v1883
    %v1885 = vrot.slane %v1880, %v1884
    %v1887 = vadd.f32 %v1877, %v1885
    %v1888 = vld [vmem:[%s8] sm:$0xff]
    %v1889 = vld [vmem:[%s8 + $0x8] sm:$0xff]
    %vm1890 = vcmask 130048
    %v1892 = vsel %vm1890, 0.0, 0
    %1894 = vmatprep.subr.mxu0 0.0
    %1895 = vmatpush1.msra.mxu0 %v1888
    %1896 = vmatprep.subr.mxu0 0.0
    %1897 = vmatpush1.msra.mxu0 %v1889
    %1898 = vmatprep.subr.mxu0 0.0
    %1899 = vmatpush1.msra.mxu0 0.0
    %1900 = vmatprep.subr.mxu0 0.0
    %1901 = vmatpush1.msra.mxu0 0.0
    %1902 = vmatprep.subr.mxu0 0.0
    %1903 = vmatpush1.msra.mxu0 0.0
    %1904 = vmatprep.subr.mxu0 0.0
    %1905 = vmatpush1.msra.mxu0 0.0
    %1906 = vmatprep.subr.mxu0 0.0
    %1907 = vmatpush1.msra.mxu0 0.0
    %1908 = vmatprep.subr.mxu0 0.0
    %1909 = vmatpush1.msra.mxu0 0.0
    %1910 = vmatprep.subr.mxu0 0.0
    %1911 = vmatpush1.msra.mxu0 0.0
    %1912 = vmatprep.subr.mxu0 0.0
    %1913 = vmatpush1.msra.mxu0 0.0
    %1914 = vmatprep.subr.mxu0 0.0
    %1915 = vmatpush1.msra.mxu0 0.0
    %1916 = vmatprep.subr.mxu0 0.0
    %1917 = vmatpush1.msra.mxu0 0.0
    %1918 = vmatprep.subr.mxu0 0.0
    %1919 = vmatpush1.msra.mxu0 0.0
    %1920 = vmatprep.subr.mxu0 0.0
    %1921 = vmatpush1.msra.mxu0 0.0
    %1922 = vmatprep.subr.mxu0 0.0
    %1923 = vmatpush1.msra.mxu0 0.0
    %1924 = vmatprep.subr.mxu0 0.0
    %1925 = vmatpush1.msra.mxu0 0.0
    %1926 = vmatprep.subr.mxu0 0.0
    %1927 = vmatpush1.msra.mxu0 0.0
    %1928 = vmatprep.subr.mxu0 0.0
    %1929 = vmatpush1.msra.mxu0 0.0
    %1930 = vmatprep.subr.mxu0 0.0
    %1931 = vmatpush1.msra.mxu0 0.0
    %1932 = vmatprep.subr.mxu0 0.0
    %1933 = vmatpush1.msra.mxu0 0.0
    %1934 = vmatprep.subr.mxu0 0.0
    %1935 = vmatpush1.msra.mxu0 0.0
    %1936 = vmatprep.subr.mxu0 0.0
    %1937 = vmatpush1.msra.mxu0 0.0
    %1938 = vmatprep.subr.mxu0 0.0
    %1939 = vmatpush1.msra.mxu0 0.0
    %1940 = vmatprep.subr.mxu0 0.0
    %1941 = vmatpush1.msra.mxu0 0.0
    %1942 = vmatprep.subr.mxu0 0.0
    %1943 = vmatpush1.msra.mxu0 0.0
    %1944 = vmatprep.subr.mxu0 0.0
    %1945 = vmatpush1.msra.mxu0 0.0
    %1946 = vmatprep.subr.mxu0 0.0
    %1947 = vmatpush1.msra.mxu0 0.0
    %1948 = vmatprep.subr.mxu0 0.0
    %1949 = vmatpush1.msra.mxu0 0.0
    %1950 = vmatprep.subr.mxu0 0.0
    %1951 = vmatpush1.msra.mxu0 0.0
    %1952 = vmatprep.subr.mxu0 0.0
    %1953 = vmatpush1.msra.mxu0 0.0
    %1954 = vmatprep.subr.mxu0 0.0
    %1955 = vmatpush1.msra.mxu0 0.0
    %1956 = vmatprep.subr.mxu0 0.0
    %1957 = vmatpush1.msra.mxu0 0.0
    %1958 = vmatprep.mubr.f32.mxu0 0.0
    %1959 = vmatmul.mubr.f32.gmra.mrb[0].mxu0 %v1892
    %v1960 = vpop.f32.mrb[0].mxu0
    %v1961 = vadd.f32 0.0, %v1960
    %v1962 = vpop.f32.mrb[0].mxu0
    %1963 = vdwg.mxu0
    %v1964 = vadd.f32 %v1887, %v1961
    %v1965 = vsub.f32 0.0, %v1964
    %v1966 = vmul.f32 %v1965, 1.442695
    %v1967 = vpow.pop %v1966
    %v1968 = vadd.f32 %v1967, 1.0
    %v1969 = vrcp.pop %v1968
    %v1970 = vtanh.pop %v1964
    %v1971 = vmul.f32 %v1969, 0.0
    %1973 = vrot.lane.b32.xlu0 %v1970, 96
    %v1974 = vpop.permute.xlu0 %1973
    %v1976 = vmul.f32 %v1969, %v1974
    %1978 = vrot.lane.b32.xlu0 %v1976, 16
    %v1979 = vpop.permute.xlu0 %1978
    %v1981 = vadd.f32 %v1971, %v1979
    %v1982 = vtanh.pop %v1981
    %1984 = vrot.lane.b32.xlu0 %v1982, 32
    %v1985 = vpop.permute.xlu0 %1984
    %v1987 = vmul.f32 %v1969, %v1985
    %1989 = vrot.lane.b32.xlu0 %v1987, 80
    %v1990 = vpop.permute.xlu0 %1989
    %v1991 = vsel %vm1890, %v1990, 0
    %1993 = vmatprep.subr.mxu0 0.0
    %1994 = vmatpush1.msra.mxu0 %v1888
    %1995 = vmatprep.subr.mxu0 0.0
    %1996 = vmatpush1.msra.mxu0 %v1889
    %1997 = vmatprep.subr.mxu0 0.0
    %1998 = vmatpush1.msra.mxu0 0.0
    %1999 = vmatprep.subr.mxu0 0.0
    %2000 = vmatpush1.msra.mxu0 0.0
    %2001 = vmatprep.subr.mxu0 0.0
    %2002 = vmatpush1.msra.mxu0 0.0
    %2003 = vmatprep.subr.mxu0 0.0
    %2004 = vmatpush1.msra.mxu0 0.0
    %2005 = vmatprep.subr.mxu0 0.0
    %2006 = vmatpush1.msra.mxu0 0.0
    %2007 = vmatprep.subr.mxu0 0.0
    %2008 = vmatpush1.msra.mxu0 0.0
    %2009 = vmatprep.subr.mxu0 0.0
    %2010 = vmatpush1.msra.mxu0 0.0
    %2011 = vmatprep.subr.mxu0 0.0
    %2012 = vmatpush1.msra.mxu0 0.0
    %2013 = vmatprep.subr.mxu0 0.0
    %2014 = vmatpush1.msra.mxu0 0.0
    %2015 = vmatprep.subr.mxu0 0.0
    %2016 = vmatpush1.msra.mxu0 0.0
    %2017 = vmatprep.subr.mxu0 0.0
    %2018 = vmatpush1.msra.mxu0 0.0
    %2019 = vmatprep.subr.mxu0 0.0
    %2020 = vmatpush1.msra.mxu0 0.0
    %2021 = vmatprep.subr.mxu0 0.0
    %2022 = vmatpush1.msra.mxu0 0.0
    %2023 = vmatprep.subr.mxu0 0.0
    %2024 = vmatpush1.msra.mxu0 0.0
    %2025 = vmatprep.subr.mxu0 0.0
    %2026 = vmatpush1.msra.mxu0 0.0
    %2027 = vmatprep.subr.mxu0 0.0
    %2028 = vmatpush1.msra.mxu0 0.0
    %2029 = vmatprep.subr.mxu0 0.0
    %2030 = vmatpush1.msra.mxu0 0.0
    %2031 = vmatprep.subr.mxu0 0.0
    %2032 = vmatpush1.msra.mxu0 0.0
    %2033 = vmatprep.subr.mxu0 0.0
    %2034 = vmatpush1.msra.mxu0 0.0
    %2035 = vmatprep.subr.mxu0 0.0
    %2036 = vmatpush1.msra.mxu0 0.0
    %2037 = vmatprep.subr.mxu0 0.0
    %2038 = vmatpush1.msra.mxu0 0.0
    %2039 = vmatprep.subr.mxu0 0.0
    %2040 = vmatpush1.msra.mxu0 0.0
    %2041 = vmatprep.subr.mxu0 0.0
    %2042 = vmatpush1.msra.mxu0 0.0
    %2043 = vmatprep.subr.mxu0 0.0
    %2044 = vmatpush1.msra.mxu0 0.0
    %2045 = vmatprep.subr.mxu0 0.0
    %2046 = vmatpush1.msra.mxu0 0.0
    %2047 = vmatprep.subr.mxu0 0.0
    %2048 = vmatpush1.msra.mxu0 0.0
    %2049 = vmatprep.subr.mxu0 0.0
    %2050 = vmatpush1.msra.mxu0 0.0
    %2051 = vmatprep.subr.mxu0 0.0
    %2052 = vmatpush1.msra.mxu0 0.0
    %2053 = vmatprep.subr.mxu0 0.0
    %2054 = vmatpush1.msra.mxu0 0.0
    %2055 = vmatprep.subr.mxu0 0.0
    %2056 = vmatpush1.msra.mxu0 0.0
    %2057 = vmatprep.mubr.f32.mxu0 0.0
    %2058 = vmatmul.mubr.f32.gmra.mrb[0].mxu0 %v1991
    %v2059 = vpop.f32.mrb[0].mxu0
    %v2060 = vadd.f32 0.0, %v2059
    %v2061 = vpop.f32.mrb[0].mxu0
    %2062 = vdwg.mxu0
    %v2064 = vrot.slane %v2060, 6
    %v2066 = vadd.f32 %v1887, %v2064
    %v2067 = vsub.f32 0.0, %v2066
    %v2068 = vmul.f32 %v2067, 1.442695
    %v2069 = vpow.pop %v2068
    %v2070 = vadd.f32 %v2069, 1.0
    %v2071 = vrcp.pop %v2070
    %v2072 = vtanh.pop %v2066
    %v2074 = vrot.slane %v1981, 6
    %v2076 = vmul.f32 %v2071, %v2074
    %2078 = vrot.lane.b32.xlu0 %v2072, 96
    %v2079 = vpop.permute.xlu0 %2078
    %v2081 = vmul.f32 %v2071, %v2079
    %2083 = vrot.lane.b32.xlu0 %v2081, 16
    %v2084 = vpop.permute.xlu0 %2083
    %v2086 = vadd.f32 %v2076, %v2084
    %v2087 = vtanh.pop %v2086
    %2089 = vrot.lane.b32.xlu0 %v2087, 32
    %v2090 = vpop.permute.xlu0 %2089
    %v2092 = vmul.f32 %v2071, %v2090
    %v2094 = vrot.slane %v2092, 2
    %2095 = vrot.lane.b32.xlu0 %v2094, 80
    %v2096 = vpop.permute.xlu0 %2095
    %v2097 = vsel %vm1890, %v2096, 0
    %2099 = vmatprep.subr.mxu0 0.0
    %2100 = vmatpush1.msra.mxu0 %v1888
    %2101 = vmatprep.subr.mxu0 0.0
    %2102 = vmatpush1.msra.mxu0 %v1889
    %2103 = vmatprep.subr.mxu0 0.0
    %2104 = vmatpush1.msra.mxu0 0.0
    %2105 = vmatprep.subr.mxu0 0.0
    %2106 = vmatpush1.msra.mxu0 0.0
    %2107 = vmatprep.subr.mxu0 0.0
    %2108 = vmatpush1.msra.mxu0 0.0
    %2109 = vmatprep.subr.mxu0 0.0
    %2110 = vmatpush1.msra.mxu0 0.0
    %2111 = vmatprep.subr.mxu0 0.0
    %2112 = vmatpush1.msra.mxu0 0.0
    %2113 = vmatprep.subr.mxu0 0.0
    %2114 = vmatpush1.msra.mxu0 0.0
    %2115 = vmatprep.subr.mxu0 0.0
    %2116 = vmatpush1.msra.mxu0 0.0
    %2117 = vmatprep.subr.mxu0 0.0
    %2118 = vmatpush1.msra.mxu0 0.0
    %2119 = vmatprep.subr.mxu0 0.0
    %2120 = vmatpush1.msra.mxu0 0.0
    %2121 = vmatprep.subr.mxu0 0.0
    %2122 = vmatpush1.msra.mxu0 0.0
    %2123 = vmatprep.subr.mxu0 0.0
    %2124 = vmatpush1.msra.mxu0 0.0
    %2125 = vmatprep.subr.mxu0 0.0
    %2126 = vmatpush1.msra.mxu0 0.0
    %2127 = vmatprep.subr.mxu0 0.0
    %2128 = vmatpush1.msra.mxu0 0.0
    %2129 = vmatprep.subr.mxu0 0.0
    %2130 = vmatpush1.msra.mxu0 0.0
    %2131 = vmatprep.subr.mxu0 0.0
    %2132 = vmatpush1.msra.mxu0 0.0
    %2133 = vmatprep.subr.mxu0 0.0
    %2134 = vmatpush1.msra.mxu0 0.0
    %2135 = vmatprep.subr.mxu0 0.0
    %2136 = vmatpush1.msra.mxu0 0.0
    %2137 = vmatprep.subr.mxu0 0.0
    %2138 = vmatpush1.msra.mxu0 0.0
    %2139 = vmatprep.subr.mxu0 0.0
    %2140 = vmatpush1.msra.mxu0 0.0
    %2141 = vmatprep.subr.mxu0 0.0
    %2142 = vmatpush1.msra.mxu0 0.0
    %2143 = vmatprep.subr.mxu0 0.0
    %2144 = vmatpush1.msra.mxu0 0.0
    %2145 = vmatprep.subr.mxu0 0.0
    %2146 = vmatpush1.msra.mxu0 0.0
    %2147 = vmatprep.subr.mxu0 0.0
    %2148 = vmatpush1.msra.mxu0 0.0
    %2149 = vmatprep.subr.mxu0 0.0
    %2150 = vmatpush1.msra.mxu0 0.0
    %2151 = vmatprep.subr.mxu0 0.0
    %2152 = vmatpush1.msra.mxu0 0.0
    %2153 = vmatprep.subr.mxu0 0.0
    %2154 = vmatpush1.msra.mxu0 0.0
    %2155 = vmatprep.subr.mxu0 0.0
    %2156 = vmatpush1.msra.mxu0 0.0
    %2157 = vmatprep.subr.mxu0 0.0
    %2158 = vmatpush1.msra.mxu0 0.0
    %2159 = vmatprep.subr.mxu0 0.0
    %2160 = vmatpush1.msra.mxu0 0.0
    %2161 = vmatprep.subr.mxu0 0.0
    %2162 = vmatpush1.msra.mxu0 0.0
    %2163 = vmatprep.mubr.f32.mxu0 0.0
    %2164 = vmatmul.mubr.f32.gmra.mrb[0].mxu0 %v2097
    %v2165 = vpop.f32.mrb[0].mxu0
    %v2166 = vadd.f32 0.0, %v2165
    %v2167 = vpop.f32.mrb[0].mxu0
    %2168 = vdwg.mxu0
    %v2170 = vrot.slane %v2166, 4
    %v2172 = vadd.f32 %v1887, %v2170
    %v2173 = vsub.f32 0.0, %v2172
    %v2174 = vmul.f32 %v2173, 1.442695
    %v2175 = vpow.pop %v2174
    %v2176 = vadd.f32 %v2175, 1.0
    %v2177 = vrcp.pop %v2176
    %v2178 = vtanh.pop %v2172
    %v2180 = vrot.slane %v2086, 6
    %v2182 = vmul.f32 %v2177, %v2180
    %2184 = vrot.lane.b32.xlu0 %v2178, 96
    %v2185 = vpop.permute.xlu0 %2184
    %v2187 = vmul.f32 %v2177, %v2185
    %2189 = vrot.lane.b32.xlu0 %v2187, 16
    %v2190 = vpop.permute.xlu0 %2189
    %v2192 = vadd.f32 %v2182, %v2190
    %v2193 = vtanh.pop %v2192
    %2195 = vrot.lane.b32.xlu0 %v2193, 32
    %v2196 = vpop.permute.xlu0 %2195
    %v2198 = vmul.f32 %v2177, %v2196
    %v2200 = vrot.slane %v2198, 4
    %2201 = vrot.lane.b32.xlu0 %v2200, 80
    %v2202 = vpop.permute.xlu0 %2201
    %v2203 = vsel %vm1890, %v2202, 0
    %2205 = vmatprep.subr.mxu0 0.0
    %2206 = vmatpush1.msra.mxu0 %v1888
    %2207 = vmatprep.subr.mxu0 0.0
    %2208 = vmatpush1.msra.mxu0 %v1889
    %2209 = vmatprep.subr.mxu0 0.0
    %2210 = vmatpush1.msra.mxu0 0.0
    %2211 = vmatprep.subr.mxu0 0.0
    %2212 = vmatpush1.msra.mxu0 0.0
    %2213 = vmatprep.subr.mxu0 0.0
    %2214 = vmatpush1.msra.mxu0 0.0
    %2215 = vmatprep.subr.mxu0 0.0
    %2216 = vmatpush1.msra.mxu0 0.0
    %2217 = vmatprep.subr.mxu0 0.0
    %2218 = vmatpush1.msra.mxu0 0.0
    %2219 = vmatprep.subr.mxu0 0.0
    %2220 = vmatpush1.msra.mxu0 0.0
    %2221 = vmatprep.subr.mxu0 0.0
    %2222 = vmatpush1.msra.mxu0 0.0
    %2223 = vmatprep.subr.mxu0 0.0
    %2224 = vmatpush1.msra.mxu0 0.0
    %2225 = vmatprep.subr.mxu0 0.0
    %2226 = vmatpush1.msra.mxu0 0.0
    %2227 = vmatprep.subr.mxu0 0.0
    %2228 = vmatpush1.msra.mxu0 0.0
    %2229 = vmatprep.subr.mxu0 0.0
    %2230 = vmatpush1.msra.mxu0 0.0
    %2231 = vmatprep.subr.mxu0 0.0
    %2232 = vmatpush1.msra.mxu0 0.0
    %2233 = vmatprep.subr.mxu0 0.0
    %2234 = vmatpush1.msra.mxu0 0.0
    %2235 = vmatprep.subr.mxu0 0.0
    %2236 = vmatpush1.msra.mxu0 0.0
    %2237 = vmatprep.subr.mxu0 0.0
    %2238 = vmatpush1.msra.mxu0 0.0
    %2239 = vmatprep.subr.mxu0 0.0
    %2240 = vmatpush1.msra.mxu0 0.0
    %2241 = vmatprep.subr.mxu0 0.0
    %2242 = vmatpush1.msra.mxu0 0.0
    %2243 = vmatprep.subr.mxu0 0.0
    %2244 = vmatpush1.msra.mxu0 0.0
    %2245 = vmatprep.subr.mxu0 0.0
    %2246 = vmatpush1.msra.mxu0 0.0
    %2247 = vmatprep.subr.mxu0 0.0
    %2248 = vmatpush1.msra.mxu0 0.0
    %2249 = vmatprep.subr.mxu0 0.0
    %2250 = vmatpush1.msra.mxu0 0.0
    %2251 = vmatprep.subr.mxu0 0.0
    %2252 = vmatpush1.msra.mxu0 0.0
    %2253 = vmatprep.subr.mxu0 0.0
    %2254 = vmatpush1.msra.mxu0 0.0
    %2255 = vmatprep.subr.mxu0 0.0
    %2256 = vmatpush1.msra.mxu0 0.0
    %2257 = vmatprep.subr.mxu0 0.0
    %2258 = vmatpush1.msra.mxu0 0.0
    %2259 = vmatprep.subr.mxu0 0.0
    %2260 = vmatpush1.msra.mxu0 0.0
    %2261 = vmatprep.subr.mxu0 0.0
    %2262 = vmatpush1.msra.mxu0 0.0
    %2263 = vmatprep.subr.mxu0 0.0
    %2264 = vmatpush1.msra.mxu0 0.0
    %2265 = vmatprep.subr.mxu0 0.0
    %2266 = vmatpush1.msra.mxu0 0.0
    %2267 = vmatprep.subr.mxu0 0.0
    %2268 = vmatpush1.msra.mxu0 0.0
    %2269 = vmatprep.mubr.f32.mxu0 0.0
    %2270 = vmatmul.mubr.f32.gmra.mrb[0].mxu0 %v2203
    %v2271 = vpop.f32.mrb[0].mxu0
    %v2272 = vadd.f32 0.0, %v2271
    %v2273 = vpop.f32.mrb[0].mxu0
    %2274 = vdwg.mxu0
    %v2276 = vrot.slane %v2272, 2
    %v2278 = vadd.f32 %v1887, %v2276
    %v2279 = vsub.f32 0.0, %v2278
    %v2280 = vmul.f32 %v2279, 1.442695
    %v2281 = vpow.pop %v2280
    %v2282 = vadd.f32 %v2281, 1.0
    %v2283 = vrcp.pop %v2282
    %v2284 = vtanh.pop %v2278
    %v2286 = vrot.slane %v2192, 6
    %v2288 = vmul.f32 %v2283, %v2286
    %2290 = vrot.lane.b32.xlu0 %v2284, 96
    %v2291 = vpop.permute.xlu0 %2290
    %v2293 = vmul.f32 %v2283, %v2291
    %2295 = vrot.lane.b32.xlu0 %v2293, 16
    %v2296 = vpop.permute.xlu0 %2295
    %v2298 = vadd.f32 %v2288, %v2296
    %v2299 = vtanh.pop %v2298
    %2301 = vrot.lane.b32.xlu0 %v2299, 32
    %v2302 = vpop.permute.xlu0 %2301
    %v2304 = vmul.f32 %v2283, %v2302
    %vm2305 = vcmask 1041408
    %v2306 = vsel %vm2305, %v1987, %v2092
    %vm2307 = vcmask 1043456
    %v2308 = vsel %vm2307, %v2306, %v2198
    %vm2309 = vcmask 1045504
    %v2310 = vsel %vm2309, %v2308, %v2304
    %v2311 = vld [vmem:[%s10] sm:$0xff]
    %v2312 = vld [vmem:[%s10 + $0x8] sm:$0xff]
    %v2313 = vld [vmem:[%s11] sm:$0x1]
    %v2315 = vlaneseq
    %v2316 = vshrl.u32 %v2315, 7
    %v2317 = vsub.s32 0, %v2316
    %v2318 = vrot.slane %v2313, %v2317
    %2321 = vrot.lane.b32.xlu0 %v2310, 80
    %v2322 = vpop.permute.xlu0 %2321
    %v2323 = vsel %vm1890, %v2322, 0
    %2325 = vmatprep.subr.mxu0 0.0
    %2326 = vmatpush1.msra.mxu0 %v2311
    %2327 = vmatprep.subr.mxu0 0.0
    %2328 = vmatpush1.msra.mxu0 %v2312
    %2329 = vmatprep.subr.mxu0 0.0
    %2330 = vmatpush1.msra.mxu0 0.0
    %2331 = vmatprep.subr.mxu0 0.0
    %2332 = vmatpush1.msra.mxu0 0.0
    %2333 = vmatprep.subr.mxu0 0.0
    %2334 = vmatpush1.msra.mxu0 0.0
    %2335 = vmatprep.subr.mxu0 0.0
    %2336 = vmatpush1.msra.mxu0 0.0
    %2337 = vmatprep.subr.mxu0 0.0
    %2338 = vmatpush1.msra.mxu0 0.0
    %2339 = vmatprep.subr.mxu0 0.0
    %2340 = vmatpush1.msra.mxu0 0.0
    %2341 = vmatprep.subr.mxu0 0.0
    %2342 = vmatpush1.msra.mxu0 0.0
    %2343 = vmatprep.subr.mxu0 0.0
    %2344 = vmatpush1.msra.mxu0 0.0
    %2345 = vmatprep.subr.mxu0 0.0
    %2346 = vmatpush1.msra.mxu0 0.0
    %2347 = vmatprep.subr.mxu0 0.0
    %2348 = vmatpush1.msra.mxu0 0.0
    %2349 = vmatprep.subr.mxu0 0.0
    %2350 = vmatpush1.msra.mxu0 0.0
    %2351 = vmatprep.subr.mxu0 0.0
    %2352 = vmatpush1.msra.mxu0 0.0
    %2353 = vmatprep.subr.mxu0 0.0
    %2354 = vmatpush1.msra.mxu0 0.0
    %2355 = vmatprep.subr.mxu0 0.0
    %2356 = vmatpush1.msra.mxu0 0.0
    %2357 = vmatprep.subr.mxu0 0.0
    %2358 = vmatpush1.msra.mxu0 0.0
    %2359 = vmatprep.subr.mxu0 0.0
    %2360 = vmatpush1.msra.mxu0 0.0
    %2361 = vmatprep.subr.mxu0 0.0
    %2362 = vmatpush1.msra.mxu0 0.0
    %2363 = vmatprep.subr.mxu0 0.0
    %2364 = vmatpush1.msra.mxu0 0.0
    %2365 = vmatprep.subr.mxu0 0.0
    %2366 = vmatpush1.msra.mxu0 0.0
    %2367 = vmatprep.subr.mxu0 0.0
    %2368 = vmatpush1.msra.mxu0 0.0
    %2369 = vmatprep.subr.mxu0 0.0
    %2370 = vmatpush1.msra.mxu0 0.0
    %2371 = vmatprep.subr.mxu0 0.0
    %2372 = vmatpush1.msra.mxu0 0.0
    %2373 = vmatprep.subr.mxu0 0.0
    %2374 = vmatpush1.msra.mxu0 0.0
    %2375 = vmatprep.subr.mxu0 0.0
    %2376 = vmatpush1.msra.mxu0 0.0
    %2377 = vmatprep.subr.mxu0 0.0
    %2378 = vmatpush1.msra.mxu0 0.0
    %2379 = vmatprep.subr.mxu0 0.0
    %2380 = vmatpush1.msra.mxu0 0.0
    %2381 = vmatprep.subr.mxu0 0.0
    %2382 = vmatpush1.msra.mxu0 0.0
    %2383 = vmatprep.subr.mxu0 0.0
    %2384 = vmatpush1.msra.mxu0 0.0
    %2385 = vmatprep.subr.mxu0 0.0
    %2386 = vmatpush1.msra.mxu0 0.0
    %2387 = vmatprep.subr.mxu0 0.0
    %2388 = vmatpush1.msra.mxu0 0.0
    %2389 = vmatprep.mubr.f32.mxu0 0.0
    %2390 = vmatmul.mubr.f32.gmra.mrb[0].mxu0 %v2323
    %v2391 = vpop.f32.mrb[0].mxu0
    %v2392 = vadd.f32 %v2318, %v2391
    %v2393 = vpop.f32.mrb[0].mxu0
    %2394 = vdwg.mxu0
    %vm2395 = vcmask 80896
    %v2396 = vsel %vm2395, %v2392, -inf
    %2397 = vmax.xlane.f32.xlu0 %v2396
    %v2398 = vpop.xlane.xlu0 %2397
    %v2399 = vsub.f32 %v2392, %v2398
    %v2400 = vmul.f32 %v2399, 1.442695
    %v2401 = vpow.pop %v2400
    %v2402 = vsel %vm2395, %v2401, 0.0
    %2403 = vadd.xlane.f32.xlu0 %v2402
    %v2404 = vpop.xlane.xlu0 %2403
    %v2405 = vlog2.pop %v2404
    %v2406 = vmul.f32 %v2405, 0.6931472
    %v2407 = vsub.f32 %v2399, %v2406
    %2408 = vst.msk [vmem:[#allocation2] sm:$0xff] %vm2395, %v2407
    // Predicated region
    $region50: #{lstm_cnn_tagger_forward.1} parent=1 // pred_check
      _
    $region51: #{lstm_cnn_tagger_forward.1} parent=1 // pred_check_branch
      %2410 = sbr.rel (0) target = $region53
    $region52: #{lstm_cnn_tagger_forward.1} parent=1 // pred_region
      %s2412 = ssub.s32 128, 128
      %2413 = vsyncadd [#allocation3], %s2412
      %s2415 = sshll.u32 [#allocation2], 4
      %s2416 = int_to_ptr.vmem [resolvable:$true] %s2415
      %2418 = dma.vmem_to_hbm [thread:$0]  %s2416, 128, %s12, [#allocation3]
    $region53: #{lstm_cnn_tagger_forward.1} parent=1 // pred_fallthru
      _
    // Predicated region
    $region54: #{lstm_cnn_tagger_forward.1} parent=1 // pred_check
      _
    $region55: #{lstm_cnn_tagger_forward.1} parent=1 // pred_check_branch
      %2420 = sbr.rel (0) target = $region57
    $region56: #{lstm_cnn_tagger_forward.1} parent=1 // pred_region
      %2421 = dma.done [#allocation3], 128
    $region57: #{lstm_cnn_tagger_forward.1} parent=1 // pred_fallthru
      _
    %2422 = vsyncpa [#allocation3], 1

</llo_original>
